<compile_context>
chip_gen: v7x
topology: tpu7x:2x2x1
jax: 0.10.0
libtpu: 0.0.40
codegen_flags: <defaults>
</compile_context>

<pallas_src>
import functools
import math

import jax
import jax.numpy as jnp
from jax import lax
from jax.experimental import pallas as pl
from jax.experimental.pallas import tpu as pltpu


# ----------------------------------------------------------------------------
# Fused kernel: embedding + temporal STDP exc/inh classify layer.
# Single invocation (no grid); all state lives in loop carries / VMEM scratch,
# the lane-dense (B, T*n_out) output block is flushed to HBM once at exit.
# ----------------------------------------------------------------------------
def _stdp_net_kernel(x_ref, wemb_ref, bemb_ref, wexc_ref, winh_ref, out_ref,
                     *scratch, train, n_steps, readout_delay, tau_trace,
                     v_decay, v_th, lr, w_max, unrolled):
    # ---- image embedding: bf16 matmul (f32 acc) -> bias -> sigmoid rate code
    rates = jax.nn.sigmoid(
        jnp.dot(x_ref[...], wemb_ref[...], preferred_element_type=jnp.float32)
        + bemb_ref[...])                                      # (B, n_in) f32

    B, n_in = rates.shape
    n_out = wexc_ref.shape[1]
    TB = n_steps * B
    alpha = jnp.float32(math.exp(-1.0 / tau_trace))

    # ---- closed-form rate->spike encoding, hoisted out of the time loop.
    # The accumulate-and-fire recurrence (acc += r; spike = acc >= 1;
    # acc -= spike) has cumulative spike count floor((t+1)*r) for r in [0,1]:
    #   spike[t] = floor((t+1)*r) - floor(t*r).
    # Rows are time-major: row = t*B + b.
    rates_rep = jnp.concatenate([rates] * n_steps, axis=0)    # (T*B, n_in)
    row = lax.broadcasted_iota(jnp.int32, (TB, n_in), 0).astype(jnp.float32)
    t_f = jnp.floor((row + 0.5) / jnp.float32(B))             # step index / row
    spikes = jnp.floor((t_f + 1.0) * rates_rep) - jnp.floor(t_f * rates_rep)

    # Effective weight (exc - inh) is the single plastic buffer; clipping
    # w_exc to [0, w_max] becomes clipping w_eff to [-w_inh, w_max - w_inh]
    # while w_inh is frozen (bounds hoisted out of the loop).
    w_eff0 = wexc_ref[...] - winh_ref[...]                    # (n_in, n_out)
    if train:
        w_lo = -winh_ref[...]
        w_hi = jnp.float32(w_max) - winh_ref[...]
    else:
        # Frozen weights: ONE MXU matmul yields all per-step synaptic currents;
        # the remaining loop is a pure-VPU LIF scan over (B, n_out) vectors.
        w_eff_bf = w_eff0.astype(jnp.bfloat16)
        i_syn_all = jnp.dot(spikes.astype(jnp.bfloat16), w_eff_bf,
                            preferred_element_type=jnp.float32)   # (T*B, n_out)

    if readout_delay > 0:
        out_ref[...] = jnp.zeros(out_ref.shape, out_ref.dtype)

    # --------------------------------------------------------- per-step math
    def lif_step(i_syn, v, spk_prev):
        v_new = v_decay * v * (1.0 - spk_prev) + i_syn        # reset, leak, drive
        spike_out = (v_new >= v_th).astype(jnp.float32)
        return v_new, spike_out

    def stdp_update(w_eff, spike_in, spike_out, tr_pre, tr_post):
        tr_pre = alpha * tr_pre + spike_in
        tr_post = alpha * tr_post + spike_out
        # dw = tr_pre^T @ spike_out - spike_in^T @ tr_post : two small MXU
        # matmuls contracting over the batch dim (no per-step concatenate /
        # sublane relayout on the serial chain).
        dw_pos = lax.dot_general(tr_pre.astype(jnp.bfloat16),
                                 spike_out.astype(jnp.bfloat16),
                                 (((0,), (0,)), ((), ())),
                                 preferred_element_type=jnp.float32)
        dw_neg = lax.dot_general(spike_in.astype(jnp.bfloat16),
                                 tr_post.astype(jnp.bfloat16),
                                 (((0,), (0,)), ((), ())),
                                 preferred_element_type=jnp.float32)
        # TODO(synk): at large n_in*n_out keep a persistent bf16 shadow of
        # w_eff to avoid the per-step full-matrix f32->bf16 re-cast.
        w_eff = jnp.clip(w_eff + jnp.float32(lr) * (dw_pos - dw_neg), w_lo, w_hi)
        return w_eff, tr_pre, tr_post

    zeros_bo = jnp.zeros((B, n_out), jnp.float32)

    # -------------------------------------------------- fully unrolled path
    if unrolled:
        v, spk = zeros_bo, zeros_bo
        if train:
            tr_pre = jnp.zeros((B, n_in), jnp.float32)
            tr_post = zeros_bo
            w_eff = w_eff0
        for t in range(n_steps):
            if train:
                spike_in = spikes[t * B:(t + 1) * B]          # static slice
                i_syn = jnp.dot(spike_in.astype(jnp.bfloat16),
                                w_eff.astype(jnp.bfloat16),
                                preferred_element_type=jnp.float32)
            else:
                i_syn = i_syn_all[t * B:(t + 1) * B]
            v, spk = lif_step(i_syn, v, spk)
            if train:
                w_eff, tr_pre, tr_post = stdp_update(w_eff, spike_in, spk,
                                                     tr_pre, tr_post)
            if t >= readout_delay:
                # Lane-dense static store: step t occupies lanes
                # [t*n_out, (t+1)*n_out) of the (B, T*n_out) output block.
                out_ref[:, t * n_out:(t + 1) * n_out] = v
        return

    # -------------------------------------------------- rolled (fori) path
    # Per-step tensors live in VMEM scratch so the loop body only does dynamic
    # sublane indexing; the lane-dense output is filled with static slices
    # after the loop.
    if train:
        spike_ref, readout_ref = scratch
        spike_ref[...] = spikes
    else:
        isyn_ref, readout_ref = scratch
        isyn_ref[...] = i_syn_all

    def body(t, carry):
        start = pl.multiple_of(t * B, B)
        if train:
            v, spk, tr_pre, tr_post, w_eff = carry
            spike_in = spike_ref[pl.ds(start, B), :]
            i_syn = jnp.dot(spike_in.astype(jnp.bfloat16),
                            w_eff.astype(jnp.bfloat16),
                            preferred_element_type=jnp.float32)
        else:
            v, spk = carry
            i_syn = isyn_ref[pl.ds(start, B), :]
        v, spk = lif_step(i_syn, v, spk)
        if train:
            w_eff, tr_pre, tr_post = stdp_update(w_eff, spike_in, spk,
                                                 tr_pre, tr_post)
        readout_ref[pl.ds(start, B), :] = v
        return (v, spk, tr_pre, tr_post, w_eff) if train else (v, spk)

    if train:
        carry0 = (zeros_bo, zeros_bo, jnp.zeros((B, n_in), jnp.float32),
                  zeros_bo, w_eff0)
    else:
        carry0 = (zeros_bo, zeros_bo)
    # Partial unroll keeps the body visible to the LLO scheduler while
    # bounding live ranges for long horizons.
    lax.fori_loop(0, n_steps, body, carry0, unroll=min(8, n_steps))

    # One pass of static, lane-dense copies into the output block.
    for t in range(readout_delay, n_steps):
        out_ref[:, t * n_out:(t + 1) * n_out] = readout_ref[t * B:(t + 1) * B, :]


# ----------------------------------------------------------------------------
# Wrapper
# ----------------------------------------------------------------------------
def stdp_classify_exc_inh_net(image, params, *, train, n_steps, readout_delay,
                              tau_trace, v_decay=0.9, v_th=0.5, lr=1e-3,
                              w_max=1.0, unroll_threshold=16):
    w_emb, b_emb, w_exc, w_inh = params
    B = image.shape[0]
    n_in, n_out = w_exc.shape

    # Flatten NCHW -> [B, C*H*W]; bf16 operands halve HBM traffic for the
    # embedding matmul (f32 accumulation inside the kernel).
    x_flat = image.reshape(B, -1).astype(jnp.bfloat16)
    w_emb_bf = w_emb.astype(jnp.bfloat16)

    unrolled = n_steps <= unroll_threshold
    if unrolled:
        scratch_shapes = []
    elif train:
        scratch_shapes = [pltpu.VMEM((n_steps * B, n_in), jnp.float32),
                          pltpu.VMEM((n_steps * B, n_out), jnp.float32)]
    else:
        scratch_shapes = [pltpu.VMEM((n_steps * B, n_out), jnp.float32),
                          pltpu.VMEM((n_steps * B, n_out), jnp.float32)]

    kernel = functools.partial(
        _stdp_net_kernel, train=train, n_steps=n_steps,
        readout_delay=readout_delay, tau_trace=tau_trace, v_decay=v_decay,
        v_th=v_th, lr=lr, w_max=w_max, unrolled=unrolled)

    # Single launch; all operands resident in VMEM; one dense lane-major
    # (B, T*n_out) HBM writeback at kernel exit.
    # TODO(synk): for much larger n_in / embedding dims, tile w_emb with a grid
    # axis (or pltpu.emit_pipeline); on v7x add a "parallel" batch/column grid
    # axis so both TensorCores are used (budget for 64 MiB physical VMEM).
    out_flat = pl.pallas_call(
        kernel,
        out_shape=jax.ShapeDtypeStruct((B, n_steps * n_out), jnp.float32),
        in_specs=[pl.BlockSpec(memory_space=pltpu.MemorySpace.VMEM)] * 5,
        out_specs=pl.BlockSpec(memory_space=pltpu.MemorySpace.VMEM),
        scratch_shapes=scratch_shapes,
        compiler_params=pltpu.CompilerParams(
            vmem_limit_bytes=32 * 1024 * 1024),   # explicit (v5e default is 16 MiB)
    )(x_flat, w_emb_bf, b_emb, w_exc, w_inh)

    # Lane-dense output: a free row-major reshape to (batch, time, features)
    # replaces the previous per-step masked stores + XLA transpose.
    return out_flat.reshape(B, n_steps, n_out)


def init_params(key, in_features, input_size, output_size):
    k0, k1, k2, k3 = jax.random.split(key, 4)
    w_emb = (jax.random.normal(k0, (in_features, input_size), jnp.float32)
             / math.sqrt(in_features))
    b_emb = jnp.zeros((1, input_size), jnp.float32)
    # excitatory and inhibitory weights are both non-negative by construction
    w_exc = jax.random.uniform(k2, (input_size, output_size), jnp.float32) * 0.5
    w_inh = jax.random.uniform(k3, (input_size, output_size), jnp.float32) * 0.2
    return (w_emb, b_emb, w_exc, w_inh)


if __name__ == "__main__":
    # Small, deterministic example consistent with the module's forward.
    B, C, H, W = 2, 4, 16, 16          # batch_size = 2, NCHW image
    input_size = 32                    # size of encoded spike population
    hidden_size = 32                   # present in __init__ but unused by forward
    output_size = 16
    n_steps = 8                        # simulation time steps
    readout_delay = 2
    tau_trace = 20.0

    key = jax.random.PRNGKey(0)
    k_img, k_par = jax.random.split(key)
    image = jax.random.uniform(k_img, (B, C, H, W), jnp.float32)
    params = init_params(k_par, C * H * W, input_size, output_size)

    outputs = stdp_classify_exc_inh_net(
        image, params, train=True, n_steps=n_steps,
        readout_delay=readout_delay, tau_trace=tau_trace)
    outputs = jax.block_until_ready(outputs)

    # Also exercise the frozen-weight (eval) path: one MXU matmul for all steps.
    outputs_eval = stdp_classify_exc_inh_net(
        image, params, train=False, n_steps=n_steps,
        readout_delay=readout_delay, tau_trace=tau_trace)
    outputs_eval = jax.block_until_ready(outputs_eval)

    assert outputs.shape == (B, n_steps, output_size)
    assert outputs.dtype == jnp.float32
    assert outputs_eval.shape == (B, n_steps, output_size)
    print("KERNEL_OK")
</pallas_src>

<mosaic_0001>
module attributes {stable_mosaic.version = 11 : i64} {
  func.func @_stdp_net_kernel(%arg0: memref<2x1024xbf16, #tpu.memory_space<vmem>>, %arg1: memref<1024x32xbf16, #tpu.memory_space<vmem>>, %arg2: memref<1x32xf32, #tpu.memory_space<vmem>>, %arg3: memref<32x16xf32, #tpu.memory_space<vmem>>, %arg4: memref<32x16xf32, #tpu.memory_space<vmem>>, %arg5: memref<2x128xf32, #tpu.memory_space<vmem>>) attributes {dimension_semantics = [], scalar_prefetch = 0 : i64, scratch_operands = 0 : i64, tpu.core_type = #tpu.core_type<tc>} {
    %c0 = arith.constant 0 : index
    %c0_0 = arith.constant 0 : index
    %0 = vector.load %arg0[%c0, %c0_0] : memref<2x1024xbf16, #tpu.memory_space<vmem>>, vector<2x1024xbf16>
    %c0_1 = arith.constant 0 : index
    %c0_2 = arith.constant 0 : index
    %1 = vector.load %arg1[%c0_1, %c0_2] : memref<1024x32xbf16, #tpu.memory_space<vmem>>, vector<1024x32xbf16>
    %cst = arith.constant dense<0.000000e+00> : vector<2x32xf32>
    %2 = tpu.matmul %0, %1, %cst {dimension_numbers = #tpu.dot_dimension_numbers<[1], [0], [0], [1], [0, 0, 1, 1], [], []>} : vector<2x1024xbf16>, vector<1024x32xbf16>, vector<2x32xf32> -> vector<2x32xf32>
    %c0_3 = arith.constant 0 : index
    %c0_4 = arith.constant 0 : index
    %3 = vector.load %arg2[%c0_3, %c0_4] : memref<1x32xf32, #tpu.memory_space<vmem>>, vector<1x32xf32>
    %4 = vector.broadcast %3 : vector<1x32xf32> to vector<2x32xf32>
    %5 = arith.addf %2, %4 : vector<2x32xf32>
    %6 = arith.negf %5 : vector<2x32xf32>
    %7 = math.exp %6 : vector<2x32xf32>
    %cst_5 = arith.constant 1.000000e+00 : f32
    %8 = vector.broadcast %cst_5 : f32 to vector<2x32xf32>
    %9 = arith.addf %8, %7 : vector<2x32xf32>
    %10 = arith.divf %8, %9 : vector<2x32xf32>
    %11 = tpu.concatenate %10, %10, %10, %10, %10, %10, %10, %10 in 0 : vector<2x32xf32>, vector<2x32xf32>, vector<2x32xf32>, vector<2x32xf32>, vector<2x32xf32>, vector<2x32xf32>, vector<2x32xf32>, vector<2x32xf32> -> vector<16x32xf32>
    %12 = tpu.iota {dimensions = array<i32: 0>} : vector<16x32xi32>
    %13 = arith.sitofp %12 : vector<16x32xi32> to vector<16x32xf32>
    %cst_6 = arith.constant 5.000000e-01 : f32
    %14 = vector.broadcast %cst_6 : f32 to vector<16x32xf32>
    %15 = arith.addf %13, %14 : vector<16x32xf32>
    %cst_7 = arith.constant 2.000000e+00 : f32
    %16 = vector.broadcast %cst_7 : f32 to vector<16x32xf32>
    %17 = arith.divf %15, %16 : vector<16x32xf32>
    %18 = math.floor %17 : vector<16x32xf32>
    %cst_8 = arith.constant 1.000000e+00 : f32
    %19 = vector.broadcast %cst_8 : f32 to vector<16x32xf32>
    %20 = arith.addf %18, %19 : vector<16x32xf32>
    %21 = arith.mulf %20, %11 : vector<16x32xf32>
    %22 = math.floor %21 : vector<16x32xf32>
    %23 = arith.mulf %18, %11 : vector<16x32xf32>
    %24 = math.floor %23 : vector<16x32xf32>
    %25 = arith.subf %22, %24 : vector<16x32xf32>
    %c0_9 = arith.constant 0 : index
    %c0_10 = arith.constant 0 : index
    %26 = vector.load %arg3[%c0_9, %c0_10] : memref<32x16xf32, #tpu.memory_space<vmem>>, vector<32x16xf32>
    %c0_11 = arith.constant 0 : index
    %c0_12 = arith.constant 0 : index
    %27 = vector.load %arg4[%c0_11, %c0_12] : memref<32x16xf32, #tpu.memory_space<vmem>>, vector<32x16xf32>
    %28 = arith.subf %26, %27 : vector<32x16xf32>
    %c0_13 = arith.constant 0 : index
    %c0_14 = arith.constant 0 : index
    %29 = vector.load %arg4[%c0_13, %c0_14] : memref<32x16xf32, #tpu.memory_space<vmem>>, vector<32x16xf32>
    %cst_15 = arith.constant 0.000000e+00 : f32
    %30 = vector.broadcast %cst_15 : f32 to vector<32x16xf32>
    %31 = arith.subf %30, %29 : vector<32x16xf32>
    %c0_16 = arith.constant 0 : index
    %c0_17 = arith.constant 0 : index
    %32 = vector.load %arg4[%c0_16, %c0_17] : memref<32x16xf32, #tpu.memory_space<vmem>>, vector<32x16xf32>
    %cst_18 = arith.constant 1.000000e+00 : f32
    %33 = vector.broadcast %cst_18 : f32 to vector<32x16xf32>
    %34 = arith.subf %33, %32 : vector<32x16xf32>
    %cst_19 = arith.constant 0.000000e+00 : f32
    %35 = vector.broadcast %cst_19 : f32 to vector<2x128xf32>
    %c0_20 = arith.constant 0 : index
    %c0_21 = arith.constant 0 : index
    %36 = vector.load %arg5[%c0_20, %c0_21] : memref<2x128xf32, #tpu.memory_space<vmem>>, vector<2x128xf32>
    tpu.vector_store %arg5[%c0_20, %c0_21], %35 {strides = array<i32>} : memref<2x128xf32, #tpu.memory_space<vmem>>, vector<2x128xf32>,
    %cst_22 = arith.constant 0.000000e+00 : f32
    %37 = vector.broadcast %cst_22 : f32 to vector<2x16xf32>
    %cst_23 = arith.constant 0.000000e+00 : f32
    %38 = vector.broadcast %cst_23 : f32 to vector<2x32xf32>
    %39 = vector.extract_strided_slice %25 {offsets = [0, 0], sizes = [2, 32], strides = [1, 1]} : vector<16x32xf32> to vector<2x32xf32>
    %40 = arith.truncf %39 : vector<2x32xf32> to vector<2x32xbf16>
    %41 = arith.truncf %28 : vector<32x16xf32> to vector<32x16xbf16>
    %cst_24 = arith.constant dense<0.000000e+00> : vector<2x16xf32>
    %42 = tpu.matmul %40, %41, %cst_24 {dimension_numbers = #tpu.dot_dimension_numbers<[1], [0], [0], [1], [0, 0, 1, 1], [], []>} : vector<2x32xbf16>, vector<32x16xbf16>, vector<2x16xf32> -> vector<2x16xf32>
    %cst_25 = arith.constant 0.899999976 : f32
    %43 = vector.broadcast %cst_25 : f32 to vector<2x16xf32>
    %44 = arith.mulf %43, %37 : vector<2x16xf32>
    %cst_26 = arith.constant 1.000000e+00 : f32
    %45 = vector.broadcast %cst_26 : f32 to vector<2x16xf32>
    %46 = arith.subf %45, %37 : vector<2x16xf32>
    %47 = arith.mulf %44, %46 : vector<2x16xf32>
    %48 = arith.addf %47, %42 : vector<2x16xf32>
    %cst_27 = arith.constant 5.000000e-01 : f32
    %49 = vector.broadcast %cst_27 : f32 to vector<2x16xf32>
    %50 = arith.cmpf oge, %48, %49 : vector<2x16xf32>
    %51 = arith.extui %50 : vector<2x16xi1> to vector<2x16xi32>
    %52 = arith.sitofp %51 : vector<2x16xi32> to vector<2x16xf32>
    %cst_28 = arith.constant 0.951229453 : f32
    %53 = vector.broadcast %cst_28 : f32 to vector<2x32xf32>
    %54 = arith.mulf %53, %38 : vector<2x32xf32>
    %55 = arith.addf %54, %39 : vector<2x32xf32>
    %cst_29 = arith.constant 0.951229453 : f32
    %56 = vector.broadcast %cst_29 : f32 to vector<2x16xf32>
    %57 = arith.mulf %56, %37 : vector<2x16xf32>
    %58 = arith.addf %57, %52 : vector<2x16xf32>
    %59 = arith.truncf %55 : vector<2x32xf32> to vector<2x32xbf16>
    %60 = arith.truncf %52 : vector<2x16xf32> to vector<2x16xbf16>
    %cst_30 = arith.constant dense<0.000000e+00> : vector<32x16xf32>
    %61 = tpu.matmul %59, %60, %cst_30 {dimension_numbers = #tpu.dot_dimension_numbers<[0], [0], [1], [1], [0, 1, 1, 1], [], []>} : vector<2x32xbf16>, vector<2x16xbf16>, vector<32x16xf32> -> vector<32x16xf32>
    %62 = arith.truncf %39 : vector<2x32xf32> to vector<2x32xbf16>
    %63 = arith.truncf %58 : vector<2x16xf32> to vector<2x16xbf16>
    %cst_31 = arith.constant dense<0.000000e+00> : vector<32x16xf32>
    %64 = tpu.matmul %62, %63, %cst_31 {dimension_numbers = #tpu.dot_dimension_numbers<[0], [0], [1], [1], [0, 1, 1, 1], [], []>} : vector<2x32xbf16>, vector<2x16xbf16>, vector<32x16xf32> -> vector<32x16xf32>
    %65 = arith.subf %61, %64 : vector<32x16xf32>
    %cst_32 = arith.constant 1.000000e-03 : f32
    %66 = vector.broadcast %cst_32 : f32 to vector<32x16xf32>
    %67 = arith.mulf %66, %65 : vector<32x16xf32>
    %68 = arith.addf %28, %67 : vector<32x16xf32>
    %69 = arith.maximumf %31, %68 : vector<32x16xf32>
    %70 = arith.minimumf %34, %69 : vector<32x16xf32>
    %71 = vector.extract_strided_slice %25 {offsets = [2, 0], sizes = [2, 32], strides = [1, 1]} : vector<16x32xf32> to vector<2x32xf32>
    %72 = arith.truncf %71 : vector<2x32xf32> to vector<2x32xbf16>
    %73 = arith.truncf %70 : vector<32x16xf32> to vector<32x16xbf16>
    %cst_33 = arith.constant dense<0.000000e+00> : vector<2x16xf32>
    %74 = tpu.matmul %72, %73, %cst_33 {dimension_numbers = #tpu.dot_dimension_numbers<[1], [0], [0], [1], [0, 0, 1, 1], [], []>} : vector<2x32xbf16>, vector<32x16xbf16>, vector<2x16xf32> -> vector<2x16xf32>
    %cst_34 = arith.constant 0.899999976 : f32
    %75 = vector.broadcast %cst_34 : f32 to vector<2x16xf32>
    %76 = arith.mulf %75, %48 : vector<2x16xf32>
    %cst_35 = arith.constant 1.000000e+00 : f32
    %77 = vector.broadcast %cst_35 : f32 to vector<2x16xf32>
    %78 = arith.subf %77, %52 : vector<2x16xf32>
    %79 = arith.mulf %76, %78 : vector<2x16xf32>
    %80 = arith.addf %79, %74 : vector<2x16xf32>
    %cst_36 = arith.constant 5.000000e-01 : f32
    %81 = vector.broadcast %cst_36 : f32 to vector<2x16xf32>
    %82 = arith.cmpf oge, %80, %81 : vector<2x16xf32>
    %83 = arith.extui %82 : vector<2x16xi1> to vector<2x16xi32>
    %84 = arith.sitofp %83 : vector<2x16xi32> to vector<2x16xf32>
    %cst_37 = arith.constant 0.951229453 : f32
    %85 = vector.broadcast %cst_37 : f32 to vector<2x32xf32>
    %86 = arith.mulf %85, %55 : vector<2x32xf32>
    %87 = arith.addf %86, %71 : vector<2x32xf32>
    %cst_38 = arith.constant 0.951229453 : f32
    %88 = vector.broadcast %cst_38 : f32 to vector<2x16xf32>
    %89 = arith.mulf %88, %58 : vector<2x16xf32>
    %90 = arith.addf %89, %84 : vector<2x16xf32>
    %91 = arith.truncf %87 : vector<2x32xf32> to vector<2x32xbf16>
    %92 = arith.truncf %84 : vector<2x16xf32> to vector<2x16xbf16>
    %cst_39 = arith.constant dense<0.000000e+00> : vector<32x16xf32>
    %93 = tpu.matmul %91, %92, %cst_39 {dimension_numbers = #tpu.dot_dimension_numbers<[0], [0], [1], [1], [0, 1, 1, 1], [], []>} : vector<2x32xbf16>, vector<2x16xbf16>, vector<32x16xf32> -> vector<32x16xf32>
    %94 = arith.truncf %71 : vector<2x32xf32> to vector<2x32xbf16>
    %95 = arith.truncf %90 : vector<2x16xf32> to vector<2x16xbf16>
    %cst_40 = arith.constant dense<0.000000e+00> : vector<32x16xf32>
    %96 = tpu.matmul %94, %95, %cst_40 {dimension_numbers = #tpu.dot_dimension_numbers<[0], [0], [1], [1], [0, 1, 1, 1], [], []>} : vector<2x32xbf16>, vector<2x16xbf16>, vector<32x16xf32> -> vector<32x16xf32>
    %97 = arith.subf %93, %96 : vector<32x16xf32>
    %cst_41 = arith.constant 1.000000e-03 : f32
    %98 = vector.broadcast %cst_41 : f32 to vector<32x16xf32>
    %99 = arith.mulf %98, %97 : vector<32x16xf32>
    %100 = arith.addf %70, %99 : vector<32x16xf32>
    %101 = arith.maximumf %31, %100 : vector<32x16xf32>
    %102 = arith.minimumf %34, %101 : vector<32x16xf32>
    %103 = vector.extract_strided_slice %25 {offsets = [4, 0], sizes = [2, 32], strides = [1, 1]} : vector<16x32xf32> to vector<2x32xf32>
    %104 = arith.truncf %103 : vector<2x32xf32> to vector<2x32xbf16>
    %105 = arith.truncf %102 : vector<32x16xf32> to vector<32x16xbf16>
    %cst_42 = arith.constant dense<0.000000e+00> : vector<2x16xf32>
    %106 = tpu.matmul %104, %105, %cst_42 {dimension_numbers = #tpu.dot_dimension_numbers<[1], [0], [0], [1], [0, 0, 1, 1], [], []>} : vector<2x32xbf16>, vector<32x16xbf16>, vector<2x16xf32> -> vector<2x16xf32>
    %cst_43 = arith.constant 0.899999976 : f32
    %107 = vector.broadcast %cst_43 : f32 to vector<2x16xf32>
    %108 = arith.mulf %107, %80 : vector<2x16xf32>
    %cst_44 = arith.constant 1.000000e+00 : f32
    %109 = vector.broadcast %cst_44 : f32 to vector<2x16xf32>
    %110 = arith.subf %109, %84 : vector<2x16xf32>
    %111 = arith.mulf %108, %110 : vector<2x16xf32>
    %112 = arith.addf %111, %106 : vector<2x16xf32>
    %cst_45 = arith.constant 5.000000e-01 : f32
    %113 = vector.broadcast %cst_45 : f32 to vector<2x16xf32>
    %114 = arith.cmpf oge, %112, %113 : vector<2x16xf32>
    %115 = arith.extui %114 : vector<2x16xi1> to vector<2x16xi32>
    %116 = arith.sitofp %115 : vector<2x16xi32> to vector<2x16xf32>
    %cst_46 = arith.constant 0.951229453 : f32
    %117 = vector.broadcast %cst_46 : f32 to vector<2x32xf32>
    %118 = arith.mulf %117, %87 : vector<2x32xf32>
    %119 = arith.addf %118, %103 : vector<2x32xf32>
    %cst_47 = arith.constant 0.951229453 : f32
    %120 = vector.broadcast %cst_47 : f32 to vector<2x16xf32>
    %121 = arith.mulf %120, %90 : vector<2x16xf32>
    %122 = arith.addf %121, %116 : vector<2x16xf32>
    %123 = arith.truncf %119 : vector<2x32xf32> to vector<2x32xbf16>
    %124 = arith.truncf %116 : vector<2x16xf32> to vector<2x16xbf16>
    %cst_48 = arith.constant dense<0.000000e+00> : vector<32x16xf32>
    %125 = tpu.matmul %123, %124, %cst_48 {dimension_numbers = #tpu.dot_dimension_numbers<[0], [0], [1], [1], [0, 1, 1, 1], [], []>} : vector<2x32xbf16>, vector<2x16xbf16>, vector<32x16xf32> -> vector<32x16xf32>
    %126 = arith.truncf %103 : vector<2x32xf32> to vector<2x32xbf16>
    %127 = arith.truncf %122 : vector<2x16xf32> to vector<2x16xbf16>
    %cst_49 = arith.constant dense<0.000000e+00> : vector<32x16xf32>
    %128 = tpu.matmul %126, %127, %cst_49 {dimension_numbers = #tpu.dot_dimension_numbers<[0], [0], [1], [1], [0, 1, 1, 1], [], []>} : vector<2x32xbf16>, vector<2x16xbf16>, vector<32x16xf32> -> vector<32x16xf32>
    %129 = arith.subf %125, %128 : vector<32x16xf32>
    %cst_50 = arith.constant 1.000000e-03 : f32
    %130 = vector.broadcast %cst_50 : f32 to vector<32x16xf32>
    %131 = arith.mulf %130, %129 : vector<32x16xf32>
    %132 = arith.addf %102, %131 : vector<32x16xf32>
    %133 = arith.maximumf %31, %132 : vector<32x16xf32>
    %134 = arith.minimumf %34, %133 : vector<32x16xf32>
    %c0_51 = arith.constant 0 : index
    %c32 = arith.constant 32 : index
    %135 = vector.load %arg5[%c0_51, %c32] : memref<2x128xf32, #tpu.memory_space<vmem>>, vector<2x16xf32>
    tpu.vector_store %arg5[%c0_51, %c32], %112 {strides = array<i32>} : memref<2x128xf32, #tpu.memory_space<vmem>>, vector<2x16xf32>,
    %136 = vector.extract_strided_slice %25 {offsets = [6, 0], sizes = [2, 32], strides = [1, 1]} : vector<16x32xf32> to vector<2x32xf32>
    %137 = arith.truncf %136 : vector<2x32xf32> to vector<2x32xbf16>
    %138 = arith.truncf %134 : vector<32x16xf32> to vector<32x16xbf16>
    %cst_52 = arith.constant dense<0.000000e+00> : vector<2x16xf32>
    %139 = tpu.matmul %137, %138, %cst_52 {dimension_numbers = #tpu.dot_dimension_numbers<[1], [0], [0], [1], [0, 0, 1, 1], [], []>} : vector<2x32xbf16>, vector<32x16xbf16>, vector<2x16xf32> -> vector<2x16xf32>
    %cst_53 = arith.constant 0.899999976 : f32
    %140 = vector.broadcast %cst_53 : f32 to vector<2x16xf32>
    %141 = arith.mulf %140, %112 : vector<2x16xf32>
    %cst_54 = arith.constant 1.000000e+00 : f32
    %142 = vector.broadcast %cst_54 : f32 to vector<2x16xf32>
    %143 = arith.subf %142, %116 : vector<2x16xf32>
    %144 = arith.mulf %141, %143 : vector<2x16xf32>
    %145 = arith.addf %144, %139 : vector<2x16xf32>
    %cst_55 = arith.constant 5.000000e-01 : f32
    %146 = vector.broadcast %cst_55 : f32 to vector<2x16xf32>
    %147 = arith.cmpf oge, %145, %146 : vector<2x16xf32>
    %148 = arith.extui %147 : vector<2x16xi1> to vector<2x16xi32>
    %149 = arith.sitofp %148 : vector<2x16xi32> to vector<2x16xf32>
    %cst_56 = arith.constant 0.951229453 : f32
    %150 = vector.broadcast %cst_56 : f32 to vector<2x32xf32>
    %151 = arith.mulf %150, %119 : vector<2x32xf32>
    %152 = arith.addf %151, %136 : vector<2x32xf32>
    %cst_57 = arith.constant 0.951229453 : f32
    %153 = vector.broadcast %cst_57 : f32 to vector<2x16xf32>
    %154 = arith.mulf %153, %122 : vector<2x16xf32>
    %155 = arith.addf %154, %149 : vector<2x16xf32>
    %156 = arith.truncf %152 : vector<2x32xf32> to vector<2x32xbf16>
    %157 = arith.truncf %149 : vector<2x16xf32> to vector<2x16xbf16>
    %cst_58 = arith.constant dense<0.000000e+00> : vector<32x16xf32>
    %158 = tpu.matmul %156, %157, %cst_58 {dimension_numbers = #tpu.dot_dimension_numbers<[0], [0], [1], [1], [0, 1, 1, 1], [], []>} : vector<2x32xbf16>, vector<2x16xbf16>, vector<32x16xf32> -> vector<32x16xf32>
    %159 = arith.truncf %136 : vector<2x32xf32> to vector<2x32xbf16>
    %160 = arith.truncf %155 : vector<2x16xf32> to vector<2x16xbf16>
    %cst_59 = arith.constant dense<0.000000e+00> : vector<32x16xf32>
    %161 = tpu.matmul %159, %160, %cst_59 {dimension_numbers = #tpu.dot_dimension_numbers<[0], [0], [1], [1], [0, 1, 1, 1], [], []>} : vector<2x32xbf16>, vector<2x16xbf16>, vector<32x16xf32> -> vector<32x16xf32>
    %162 = arith.subf %158, %161 : vector<32x16xf32>
    %cst_60 = arith.constant 1.000000e-03 : f32
    %163 = vector.broadcast %cst_60 : f32 to vector<32x16xf32>
    %164 = arith.mulf %163, %162 : vector<32x16xf32>
    %165 = arith.addf %134, %164 : vector<32x16xf32>
    %166 = arith.maximumf %31, %165 : vector<32x16xf32>
    %167 = arith.minimumf %34, %166 : vector<32x16xf32>
    %c0_61 = arith.constant 0 : index
    %c48 = arith.constant 48 : index
    %168 = vector.load %arg5[%c0_61, %c48] : memref<2x128xf32, #tpu.memory_space<vmem>>, vector<2x16xf32>
    tpu.vector_store %arg5[%c0_61, %c48], %145 {strides = array<i32>} : memref<2x128xf32, #tpu.memory_space<vmem>>, vector<2x16xf32>,
    %169 = vector.extract_strided_slice %25 {offsets = [8, 0], sizes = [2, 32], strides = [1, 1]} : vector<16x32xf32> to vector<2x32xf32>
    %170 = arith.truncf %169 : vector<2x32xf32> to vector<2x32xbf16>
    %171 = arith.truncf %167 : vector<32x16xf32> to vector<32x16xbf16>
    %cst_62 = arith.constant dense<0.000000e+00> : vector<2x16xf32>
    %172 = tpu.matmul %170, %171, %cst_62 {dimension_numbers = #tpu.dot_dimension_numbers<[1], [0], [0], [1], [0, 0, 1, 1], [], []>} : vector<2x32xbf16>, vector<32x16xbf16>, vector<2x16xf32> -> vector<2x16xf32>
    %cst_63 = arith.constant 0.899999976 : f32
    %173 = vector.broadcast %cst_63 : f32 to vector<2x16xf32>
    %174 = arith.mulf %173, %145 : vector<2x16xf32>
    %cst_64 = arith.constant 1.000000e+00 : f32
    %175 = vector.broadcast %cst_64 : f32 to vector<2x16xf32>
    %176 = arith.subf %175, %149 : vector<2x16xf32>
    %177 = arith.mulf %174, %176 : vector<2x16xf32>
    %178 = arith.addf %177, %172 : vector<2x16xf32>
    %cst_65 = arith.constant 5.000000e-01 : f32
    %179 = vector.broadcast %cst_65 : f32 to vector<2x16xf32>
    %180 = arith.cmpf oge, %178, %179 : vector<2x16xf32>
    %181 = arith.extui %180 : vector<2x16xi1> to vector<2x16xi32>
    %182 = arith.sitofp %181 : vector<2x16xi32> to vector<2x16xf32>
    %cst_66 = arith.constant 0.951229453 : f32
    %183 = vector.broadcast %cst_66 : f32 to vector<2x32xf32>
    %184 = arith.mulf %183, %152 : vector<2x32xf32>
    %185 = arith.addf %184, %169 : vector<2x32xf32>
    %cst_67 = arith.constant 0.951229453 : f32
    %186 = vector.broadcast %cst_67 : f32 to vector<2x16xf32>
    %187 = arith.mulf %186, %155 : vector<2x16xf32>
    %188 = arith.addf %187, %182 : vector<2x16xf32>
    %189 = arith.truncf %185 : vector<2x32xf32> to vector<2x32xbf16>
    %190 = arith.truncf %182 : vector<2x16xf32> to vector<2x16xbf16>
    %cst_68 = arith.constant dense<0.000000e+00> : vector<32x16xf32>
    %191 = tpu.matmul %189, %190, %cst_68 {dimension_numbers = #tpu.dot_dimension_numbers<[0], [0], [1], [1], [0, 1, 1, 1], [], []>} : vector<2x32xbf16>, vector<2x16xbf16>, vector<32x16xf32> -> vector<32x16xf32>
    %192 = arith.truncf %169 : vector<2x32xf32> to vector<2x32xbf16>
    %193 = arith.truncf %188 : vector<2x16xf32> to vector<2x16xbf16>
    %cst_69 = arith.constant dense<0.000000e+00> : vector<32x16xf32>
    %194 = tpu.matmul %192, %193, %cst_69 {dimension_numbers = #tpu.dot_dimension_numbers<[0], [0], [1], [1], [0, 1, 1, 1], [], []>} : vector<2x32xbf16>, vector<2x16xbf16>, vector<32x16xf32> -> vector<32x16xf32>
    %195 = arith.subf %191, %194 : vector<32x16xf32>
    %cst_70 = arith.constant 1.000000e-03 : f32
    %196 = vector.broadcast %cst_70 : f32 to vector<32x16xf32>
    %197 = arith.mulf %196, %195 : vector<32x16xf32>
    %198 = arith.addf %167, %197 : vector<32x16xf32>
    %199 = arith.maximumf %31, %198 : vector<32x16xf32>
    %200 = arith.minimumf %34, %199 : vector<32x16xf32>
    %c0_71 = arith.constant 0 : index
    %c64 = arith.constant 64 : index
    %201 = vector.load %arg5[%c0_71, %c64] : memref<2x128xf32, #tpu.memory_space<vmem>>, vector<2x16xf32>
    tpu.vector_store %arg5[%c0_71, %c64], %178 {strides = array<i32>} : memref<2x128xf32, #tpu.memory_space<vmem>>, vector<2x16xf32>,
    %202 = vector.extract_strided_slice %25 {offsets = [10, 0], sizes = [2, 32], strides = [1, 1]} : vector<16x32xf32> to vector<2x32xf32>
    %203 = arith.truncf %202 : vector<2x32xf32> to vector<2x32xbf16>
    %204 = arith.truncf %200 : vector<32x16xf32> to vector<32x16xbf16>
    %cst_72 = arith.constant dense<0.000000e+00> : vector<2x16xf32>
    %205 = tpu.matmul %203, %204, %cst_72 {dimension_numbers = #tpu.dot_dimension_numbers<[1], [0], [0], [1], [0, 0, 1, 1], [], []>} : vector<2x32xbf16>, vector<32x16xbf16>, vector<2x16xf32> -> vector<2x16xf32>
    %cst_73 = arith.constant 0.899999976 : f32
    %206 = vector.broadcast %cst_73 : f32 to vector<2x16xf32>
    %207 = arith.mulf %206, %178 : vector<2x16xf32>
    %cst_74 = arith.constant 1.000000e+00 : f32
    %208 = vector.broadcast %cst_74 : f32 to vector<2x16xf32>
    %209 = arith.subf %208, %182 : vector<2x16xf32>
    %210 = arith.mulf %207, %209 : vector<2x16xf32>
    %211 = arith.addf %210, %205 : vector<2x16xf32>
    %cst_75 = arith.constant 5.000000e-01 : f32
    %212 = vector.broadcast %cst_75 : f32 to vector<2x16xf32>
    %213 = arith.cmpf oge, %211, %212 : vector<2x16xf32>
    %214 = arith.extui %213 : vector<2x16xi1> to vector<2x16xi32>
    %215 = arith.sitofp %214 : vector<2x16xi32> to vector<2x16xf32>
    %cst_76 = arith.constant 0.951229453 : f32
    %216 = vector.broadcast %cst_76 : f32 to vector<2x32xf32>
    %217 = arith.mulf %216, %185 : vector<2x32xf32>
    %218 = arith.addf %217, %202 : vector<2x32xf32>
    %cst_77 = arith.constant 0.951229453 : f32
    %219 = vector.broadcast %cst_77 : f32 to vector<2x16xf32>
    %220 = arith.mulf %219, %188 : vector<2x16xf32>
    %221 = arith.addf %220, %215 : vector<2x16xf32>
    %222 = arith.truncf %218 : vector<2x32xf32> to vector<2x32xbf16>
    %223 = arith.truncf %215 : vector<2x16xf32> to vector<2x16xbf16>
    %cst_78 = arith.constant dense<0.000000e+00> : vector<32x16xf32>
    %224 = tpu.matmul %222, %223, %cst_78 {dimension_numbers = #tpu.dot_dimension_numbers<[0], [0], [1], [1], [0, 1, 1, 1], [], []>} : vector<2x32xbf16>, vector<2x16xbf16>, vector<32x16xf32> -> vector<32x16xf32>
    %225 = arith.truncf %202 : vector<2x32xf32> to vector<2x32xbf16>
    %226 = arith.truncf %221 : vector<2x16xf32> to vector<2x16xbf16>
    %cst_79 = arith.constant dense<0.000000e+00> : vector<32x16xf32>
    %227 = tpu.matmul %225, %226, %cst_79 {dimension_numbers = #tpu.dot_dimension_numbers<[0], [0], [1], [1], [0, 1, 1, 1], [], []>} : vector<2x32xbf16>, vector<2x16xbf16>, vector<32x16xf32> -> vector<32x16xf32>
    %228 = arith.subf %224, %227 : vector<32x16xf32>
    %cst_80 = arith.constant 1.000000e-03 : f32
    %229 = vector.broadcast %cst_80 : f32 to vector<32x16xf32>
    %230 = arith.mulf %229, %228 : vector<32x16xf32>
    %231 = arith.addf %200, %230 : vector<32x16xf32>
    %232 = arith.maximumf %31, %231 : vector<32x16xf32>
    %233 = arith.minimumf %34, %232 : vector<32x16xf32>
    %c0_81 = arith.constant 0 : index
    %c80 = arith.constant 80 : index
    %234 = vector.load %arg5[%c0_81, %c80] : memref<2x128xf32, #tpu.memory_space<vmem>>, vector<2x16xf32>
    tpu.vector_store %arg5[%c0_81, %c80], %211 {strides = array<i32>} : memref<2x128xf32, #tpu.memory_space<vmem>>, vector<2x16xf32>,
    %235 = vector.extract_strided_slice %25 {offsets = [12, 0], sizes = [2, 32], strides = [1, 1]} : vector<16x32xf32> to vector<2x32xf32>
    %236 = arith.truncf %235 : vector<2x32xf32> to vector<2x32xbf16>
    %237 = arith.truncf %233 : vector<32x16xf32> to vector<32x16xbf16>
    %cst_82 = arith.constant dense<0.000000e+00> : vector<2x16xf32>
    %238 = tpu.matmul %236, %237, %cst_82 {dimension_numbers = #tpu.dot_dimension_numbers<[1], [0], [0], [1], [0, 0, 1, 1], [], []>} : vector<2x32xbf16>, vector<32x16xbf16>, vector<2x16xf32> -> vector<2x16xf32>
    %cst_83 = arith.constant 0.899999976 : f32
    %239 = vector.broadcast %cst_83 : f32 to vector<2x16xf32>
    %240 = arith.mulf %239, %211 : vector<2x16xf32>
    %cst_84 = arith.constant 1.000000e+00 : f32
    %241 = vector.broadcast %cst_84 : f32 to vector<2x16xf32>
    %242 = arith.subf %241, %215 : vector<2x16xf32>
    %243 = arith.mulf %240, %242 : vector<2x16xf32>
    %244 = arith.addf %243, %238 : vector<2x16xf32>
    %cst_85 = arith.constant 5.000000e-01 : f32
    %245 = vector.broadcast %cst_85 : f32 to vector<2x16xf32>
    %246 = arith.cmpf oge, %244, %245 : vector<2x16xf32>
    %247 = arith.extui %246 : vector<2x16xi1> to vector<2x16xi32>
    %248 = arith.sitofp %247 : vector<2x16xi32> to vector<2x16xf32>
    %cst_86 = arith.constant 0.951229453 : f32
    %249 = vector.broadcast %cst_86 : f32 to vector<2x32xf32>
    %250 = arith.mulf %249, %218 : vector<2x32xf32>
    %251 = arith.addf %250, %235 : vector<2x32xf32>
    %cst_87 = arith.constant 0.951229453 : f32
    %252 = vector.broadcast %cst_87 : f32 to vector<2x16xf32>
    %253 = arith.mulf %252, %221 : vector<2x16xf32>
    %254 = arith.addf %253, %248 : vector<2x16xf32>
    %255 = arith.truncf %251 : vector<2x32xf32> to vector<2x32xbf16>
    %256 = arith.truncf %248 : vector<2x16xf32> to vector<2x16xbf16>
    %cst_88 = arith.constant dense<0.000000e+00> : vector<32x16xf32>
    %257 = tpu.matmul %255, %256, %cst_88 {dimension_numbers = #tpu.dot_dimension_numbers<[0], [0], [1], [1], [0, 1, 1, 1], [], []>} : vector<2x32xbf16>, vector<2x16xbf16>, vector<32x16xf32> -> vector<32x16xf32>
    %258 = arith.truncf %235 : vector<2x32xf32> to vector<2x32xbf16>
    %259 = arith.truncf %254 : vector<2x16xf32> to vector<2x16xbf16>
    %cst_89 = arith.constant dense<0.000000e+00> : vector<32x16xf32>
    %260 = tpu.matmul %258, %259, %cst_89 {dimension_numbers = #tpu.dot_dimension_numbers<[0], [0], [1], [1], [0, 1, 1, 1], [], []>} : vector<2x32xbf16>, vector<2x16xbf16>, vector<32x16xf32> -> vector<32x16xf32>
    %261 = arith.subf %257, %260 : vector<32x16xf32>
    %cst_90 = arith.constant 1.000000e-03 : f32
    %262 = vector.broadcast %cst_90 : f32 to vector<32x16xf32>
    %263 = arith.mulf %262, %261 : vector<32x16xf32>
    %264 = arith.addf %233, %263 : vector<32x16xf32>
    %265 = arith.maximumf %31, %264 : vector<32x16xf32>
    %266 = arith.minimumf %34, %265 : vector<32x16xf32>
    %c0_91 = arith.constant 0 : index
    %c96 = arith.constant 96 : index
    %267 = vector.load %arg5[%c0_91, %c96] : memref<2x128xf32, #tpu.memory_space<vmem>>, vector<2x16xf32>
    tpu.vector_store %arg5[%c0_91, %c96], %244 {strides = array<i32>} : memref<2x128xf32, #tpu.memory_space<vmem>>, vector<2x16xf32>,
    %268 = vector.extract_strided_slice %25 {offsets = [14, 0], sizes = [2, 32], strides = [1, 1]} : vector<16x32xf32> to vector<2x32xf32>
    %269 = arith.truncf %268 : vector<2x32xf32> to vector<2x32xbf16>
    %270 = arith.truncf %266 : vector<32x16xf32> to vector<32x16xbf16>
    %cst_92 = arith.constant dense<0.000000e+00> : vector<2x16xf32>
    %271 = tpu.matmul %269, %270, %cst_92 {dimension_numbers = #tpu.dot_dimension_numbers<[1], [0], [0], [1], [0, 0, 1, 1], [], []>} : vector<2x32xbf16>, vector<32x16xbf16>, vector<2x16xf32> -> vector<2x16xf32>
    %cst_93 = arith.constant 0.899999976 : f32
    %272 = vector.broadcast %cst_93 : f32 to vector<2x16xf32>
    %273 = arith.mulf %272, %244 : vector<2x16xf32>
    %cst_94 = arith.constant 1.000000e+00 : f32
    %274 = vector.broadcast %cst_94 : f32 to vector<2x16xf32>
    %275 = arith.subf %274, %248 : vector<2x16xf32>
    %276 = arith.mulf %273, %275 : vector<2x16xf32>
    %277 = arith.addf %276, %271 : vector<2x16xf32>
    %c0_95 = arith.constant 0 : index
    %c112 = arith.constant 112 : index
    %278 = vector.load %arg5[%c0_95, %c112] : memref<2x128xf32, #tpu.memory_space<vmem>>, vector<2x16xf32>
    tpu.vector_store %arg5[%c0_95, %c112], %277 {strides = array<i32>} : memref<2x128xf32, #tpu.memory_space<vmem>>, vector<2x16xf32>,
    return
  }
}

</mosaic_0001>

<llo_original>
// kernel: tpu_custom_call.1
$region0: #{tpu_custom_call.1}
  #allocation0 [shape = 'u32[]', space=smem, size = 0x4, offset = 0x4, fixed_abs, tag = 'smem constant byte address 0x4 - core index']
  #allocation1 [shape = 'u32[144,128]{1,0:T(1,128)}', space=vmem, size = 0x12000, scoped, tag = 'internal scratch']
  %s0 = inlined_call_operand.vmem [shape: bf16[2,1024], index: 0, kind: input, shape index: {}]
  %s1 = inlined_call_operand.vmem [shape: bf16[1024,32], index: 1, kind: input, shape index: {}]
  %s2 = inlined_call_operand.vmem [shape: f32[1,32], index: 2, kind: input, shape index: {}]
  %s3 = inlined_call_operand.vmem [shape: f32[32,16], index: 3, kind: input, shape index: {}]
  %s4 = inlined_call_operand.vmem [shape: f32[32,16], index: 4, kind: input, shape index: {}]
  %s5 = inlined_call_operand.hbm [shape: f32[2,128], index: 5, kind: output, shape index: {}]
  %s6 = sld [smem:[#allocation0]]
  $region30: #{tpu_custom_call.1} parent=0
    _
  %s8 = ssub.s32 1, %s6
  %s9 = scalar_select 0, %s8, %s6
  $region1: #{tpu_custom_call.1} parent=0
    #allocation2 [shape = 'u8[1024]{0}', space=vmem, size = 0x400, scoped, tag = 'output window, operand 0, single buffered']
    #allocation3 [shape = 's32[1]{0}', space=sflag, size = 0x4, scoped, tag = 'scoped memory for tpu_custom_call.1']
    %10 = vsyncpa [#allocation3], 0
    // Predicated region
    $region2: #{tpu_custom_call.1} parent=1 // pred_check
      _
    $region3: #{tpu_custom_call.1} parent=1 // pred_check_branch
      %12 = sbr.rel (0) target = $region5
    $region4: #{tpu_custom_call.1} parent=1 // pred_region
      _
    $region5: #{tpu_custom_call.1} parent=1 // pred_fallthru
      _
    // Predicated region
    $region6: #{tpu_custom_call.1} parent=1 // pred_check
      _
    $region7: #{tpu_custom_call.1} parent=1 // pred_check_branch
      %14 = sbr.rel (0) target = $region9
    $region8: #{tpu_custom_call.1} parent=1 // pred_region
      _
    $region9: #{tpu_custom_call.1} parent=1 // pred_fallthru
      _
    // Predicated region
    $region10: #{tpu_custom_call.1} parent=1 // pred_check
      _
    $region11: #{tpu_custom_call.1} parent=1 // pred_check_branch
      %16 = sbr.rel (0) target = $region13
    $region12: #{tpu_custom_call.1} parent=1 // pred_region
      _
    $region13: #{tpu_custom_call.1} parent=1 // pred_fallthru
      _
    // Predicated region
    $region14: #{tpu_custom_call.1} parent=1 // pred_check
      _
    $region15: #{tpu_custom_call.1} parent=1 // pred_check_branch
      %18 = sbr.rel (0) target = $region17
    $region16: #{tpu_custom_call.1} parent=1 // pred_region
      _
    $region17: #{tpu_custom_call.1} parent=1 // pred_fallthru
      _
    // Predicated region
    $region18: #{tpu_custom_call.1} parent=1 // pred_check
      _
    $region19: #{tpu_custom_call.1} parent=1 // pred_check_branch
      %20 = sbr.rel (0) target = $region21
    $region20: #{tpu_custom_call.1} parent=1 // pred_region
      _
    $region21: #{tpu_custom_call.1} parent=1 // pred_fallthru
      _
    %v22 = vld [vmem:[%s0] sm:$0xff]
    %v23 = vld [vmem:[%s1] sm:$0xf]
    %v24 = vld [vmem:[%s1 + $0x4] sm:$0xf]
    %v25 = vld [vmem:[%s1 + $0x8] sm:$0xf]
    %v26 = vld [vmem:[%s1 + $0xc] sm:$0xf]
    %v27 = vld [vmem:[%s1 + $0x10] sm:$0xf]
    %v28 = vld [vmem:[%s1 + $0x14] sm:$0xf]
    %v29 = vld [vmem:[%s1 + $0x18] sm:$0xf]
    %v30 = vld [vmem:[%s1 + $0x1c] sm:$0xf]
    %v31 = vld [vmem:[%s1 + $0x20] sm:$0xf]
    %v32 = vld [vmem:[%s1 + $0x24] sm:$0xf]
    %v33 = vld [vmem:[%s1 + $0x28] sm:$0xf]
    %v34 = vld [vmem:[%s1 + $0x2c] sm:$0xf]
    %v35 = vld [vmem:[%s1 + $0x30] sm:$0xf]
    %v36 = vld [vmem:[%s1 + $0x34] sm:$0xf]
    %v37 = vld [vmem:[%s1 + $0x38] sm:$0xf]
    %v38 = vld [vmem:[%s1 + $0x3c] sm:$0xf]
    %v39 = vld [vmem:[%s1 + $0x40] sm:$0xf]
    %v40 = vld [vmem:[%s1 + $0x44] sm:$0xf]
    %v41 = vld [vmem:[%s1 + $0x48] sm:$0xf]
    %v42 = vld [vmem:[%s1 + $0x4c] sm:$0xf]
    %v43 = vld [vmem:[%s1 + $0x50] sm:$0xf]
    %v44 = vld [vmem:[%s1 + $0x54] sm:$0xf]
    %v45 = vld [vmem:[%s1 + $0x58] sm:$0xf]
    %v46 = vld [vmem:[%s1 + $0x5c] sm:$0xf]
    %v47 = vld [vmem:[%s1 + $0x60] sm:$0xf]
    %v48 = vld [vmem:[%s1 + $0x64] sm:$0xf]
    %v49 = vld [vmem:[%s1 + $0x68] sm:$0xf]
    %v50 = vld [vmem:[%s1 + $0x6c] sm:$0xf]
    %v51 = vld [vmem:[%s1 + $0x70] sm:$0xf]
    %v52 = vld [vmem:[%s1 + $0x74] sm:$0xf]
    %v53 = vld [vmem:[%s1 + $0x78] sm:$0xf]
    %v54 = vld [vmem:[%s1 + $0x7c] sm:$0xf]
    %v55 = vld [vmem:[%s1 + $0x80] sm:$0xf]
    %v56 = vld [vmem:[%s1 + $0x84] sm:$0xf]
    %v57 = vld [vmem:[%s1 + $0x88] sm:$0xf]
    %v58 = vld [vmem:[%s1 + $0x8c] sm:$0xf]
    %v59 = vld [vmem:[%s1 + $0x90] sm:$0xf]
    %v60 = vld [vmem:[%s1 + $0x94] sm:$0xf]
    %v61 = vld [vmem:[%s1 + $0x98] sm:$0xf]
    %v62 = vld [vmem:[%s1 + $0x9c] sm:$0xf]
    %v63 = vld [vmem:[%s1 + $0xa0] sm:$0xf]
    %v64 = vld [vmem:[%s1 + $0xa4] sm:$0xf]
    %v65 = vld [vmem:[%s1 + $0xa8] sm:$0xf]
    %v66 = vld [vmem:[%s1 + $0xac] sm:$0xf]
    %v67 = vld [vmem:[%s1 + $0xb0] sm:$0xf]
    %v68 = vld [vmem:[%s1 + $0xb4] sm:$0xf]
    %v69 = vld [vmem:[%s1 + $0xb8] sm:$0xf]
    %v70 = vld [vmem:[%s1 + $0xbc] sm:$0xf]
    %v71 = vld [vmem:[%s1 + $0xc0] sm:$0xf]
    %v72 = vld [vmem:[%s1 + $0xc4] sm:$0xf]
    %v73 = vld [vmem:[%s1 + $0xc8] sm:$0xf]
    %v74 = vld [vmem:[%s1 + $0xcc] sm:$0xf]
    %v75 = vld [vmem:[%s1 + $0xd0] sm:$0xf]
    %v76 = vld [vmem:[%s1 + $0xd4] sm:$0xf]
    %v77 = vld [vmem:[%s1 + $0xd8] sm:$0xf]
    %v78 = vld [vmem:[%s1 + $0xdc] sm:$0xf]
    %v79 = vld [vmem:[%s1 + $0xe0] sm:$0xf]
    %v80 = vld [vmem:[%s1 + $0xe4] sm:$0xf]
    %v81 = vld [vmem:[%s1 + $0xe8] sm:$0xf]
    %v82 = vld [vmem:[%s1 + $0xec] sm:$0xf]
    %v83 = vld [vmem:[%s1 + $0xf0] sm:$0xf]
    %v84 = vld [vmem:[%s1 + $0xf4] sm:$0xf]
    %v85 = vld [vmem:[%s1 + $0xf8] sm:$0xf]
    %v86 = vld [vmem:[%s1 + $0xfc] sm:$0xf]
    %v87 = vld [vmem:[%s1 + $0x100] sm:$0xf]
    %v88 = vld [vmem:[%s1 + $0x104] sm:$0xf]
    %v89 = vld [vmem:[%s1 + $0x108] sm:$0xf]
    %v90 = vld [vmem:[%s1 + $0x10c] sm:$0xf]
    %v91 = vld [vmem:[%s1 + $0x110] sm:$0xf]
    %v92 = vld [vmem:[%s1 + $0x114] sm:$0xf]
    %v93 = vld [vmem:[%s1 + $0x118] sm:$0xf]
    %v94 = vld [vmem:[%s1 + $0x11c] sm:$0xf]
    %v95 = vld [vmem:[%s1 + $0x120] sm:$0xf]
    %v96 = vld [vmem:[%s1 + $0x124] sm:$0xf]
    %v97 = vld [vmem:[%s1 + $0x128] sm:$0xf]
    %v98 = vld [vmem:[%s1 + $0x12c] sm:$0xf]
    %v99 = vld [vmem:[%s1 + $0x130] sm:$0xf]
    %v100 = vld [vmem:[%s1 + $0x134] sm:$0xf]
    %v101 = vld [vmem:[%s1 + $0x138] sm:$0xf]
    %v102 = vld [vmem:[%s1 + $0x13c] sm:$0xf]
    %v103 = vld [vmem:[%s1 + $0x140] sm:$0xf]
    %v104 = vld [vmem:[%s1 + $0x144] sm:$0xf]
    %v105 = vld [vmem:[%s1 + $0x148] sm:$0xf]
    %v106 = vld [vmem:[%s1 + $0x14c] sm:$0xf]
    %v107 = vld [vmem:[%s1 + $0x150] sm:$0xf]
    %v108 = vld [vmem:[%s1 + $0x154] sm:$0xf]
    %v109 = vld [vmem:[%s1 + $0x158] sm:$0xf]
    %v110 = vld [vmem:[%s1 + $0x15c] sm:$0xf]
    %v111 = vld [vmem:[%s1 + $0x160] sm:$0xf]
    %v112 = vld [vmem:[%s1 + $0x164] sm:$0xf]
    %v113 = vld [vmem:[%s1 + $0x168] sm:$0xf]
    %v114 = vld [vmem:[%s1 + $0x16c] sm:$0xf]
    %v115 = vld [vmem:[%s1 + $0x170] sm:$0xf]
    %v116 = vld [vmem:[%s1 + $0x174] sm:$0xf]
    %v117 = vld [vmem:[%s1 + $0x178] sm:$0xf]
    %v118 = vld [vmem:[%s1 + $0x17c] sm:$0xf]
    %v119 = vld [vmem:[%s1 + $0x180] sm:$0xf]
    %v120 = vld [vmem:[%s1 + $0x184] sm:$0xf]
    %v121 = vld [vmem:[%s1 + $0x188] sm:$0xf]
    %v122 = vld [vmem:[%s1 + $0x18c] sm:$0xf]
    %v123 = vld [vmem:[%s1 + $0x190] sm:$0xf]
    %v124 = vld [vmem:[%s1 + $0x194] sm:$0xf]
    %v125 = vld [vmem:[%s1 + $0x198] sm:$0xf]
    %v126 = vld [vmem:[%s1 + $0x19c] sm:$0xf]
    %v127 = vld [vmem:[%s1 + $0x1a0] sm:$0xf]
    %v128 = vld [vmem:[%s1 + $0x1a4] sm:$0xf]
    %v129 = vld [vmem:[%s1 + $0x1a8] sm:$0xf]
    %v130 = vld [vmem:[%s1 + $0x1ac] sm:$0xf]
    %v131 = vld [vmem:[%s1 + $0x1b0] sm:$0xf]
    %v132 = vld [vmem:[%s1 + $0x1b4] sm:$0xf]
    %v133 = vld [vmem:[%s1 + $0x1b8] sm:$0xf]
    %v134 = vld [vmem:[%s1 + $0x1bc] sm:$0xf]
    %v135 = vld [vmem:[%s1 + $0x1c0] sm:$0xf]
    %v136 = vld [vmem:[%s1 + $0x1c4] sm:$0xf]
    %v137 = vld [vmem:[%s1 + $0x1c8] sm:$0xf]
    %v138 = vld [vmem:[%s1 + $0x1cc] sm:$0xf]
    %v139 = vld [vmem:[%s1 + $0x1d0] sm:$0xf]
    %v140 = vld [vmem:[%s1 + $0x1d4] sm:$0xf]
    %v141 = vld [vmem:[%s1 + $0x1d8] sm:$0xf]
    %v142 = vld [vmem:[%s1 + $0x1dc] sm:$0xf]
    %v143 = vld [vmem:[%s1 + $0x1e0] sm:$0xf]
    %v144 = vld [vmem:[%s1 + $0x1e4] sm:$0xf]
    %v145 = vld [vmem:[%s1 + $0x1e8] sm:$0xf]
    %v146 = vld [vmem:[%s1 + $0x1ec] sm:$0xf]
    %v147 = vld [vmem:[%s1 + $0x1f0] sm:$0xf]
    %v148 = vld [vmem:[%s1 + $0x1f4] sm:$0xf]
    %v149 = vld [vmem:[%s1 + $0x1f8] sm:$0xf]
    %v150 = vld [vmem:[%s1 + $0x1fc] sm:$0xf]
    %v151 = vld [vmem:[%s2] sm:$0x1]
    %v153 = vlaneseq
    %v154 = vshrl.u32 %v153, 7
    %v155 = vsub.s32 0, %v154
    %v156 = vrot.slane %v151, %v155
    %v159 = vcombine.high %v22, %v22
    %v161 = vunpack.c.l.s4 1966171168
    %v162 = vunpack.c.0.s8 %v161
    %v163 = vlaneseq
    %v164 = vshrl.u32 %v163, 7
    %v165 = vsub.s32 %v162, %v164
    %v166 = vrot.slane %v22, %v165
    %v168 = vunpack.c.l.s4 1966171168
    %v169 = vunpack.c.0.s8 %v168
    %v170 = vlaneseq
    %v171 = vshrl.u32 %v170, 7
    %v172 = vsub.s32 %v169, %v171
    %v173 = vrot.slane %v159, %v172
    %v174 = vcombine.high %v166, %v166
    %v175 = vcombine.high %v173, %v173
    %v177 = vunpack.c.l.s4 1966171168
    %v178 = vunpack.c.0.s8 %v177
    %v179 = vlaneseq
    %v180 = vshrl.u32 %v179, 7
    %v181 = vsub.s32 %v178, %v180
    %v182 = vrot.slane %v166, %v181
    %v184 = vunpack.c.l.s4 1966171168
    %v185 = vunpack.c.0.s8 %v184
    %v186 = vlaneseq
    %v187 = vshrl.u32 %v186, 7
    %v188 = vsub.s32 %v185, %v187
    %v189 = vrot.slane %v173, %v188
    %v191 = vunpack.c.l.s4 1966171168
    %v192 = vunpack.c.0.s8 %v191
    %v193 = vlaneseq
    %v194 = vshrl.u32 %v193, 7
    %v195 = vsub.s32 %v192, %v194
    %v196 = vrot.slane %v174, %v195
    %v198 = vunpack.c.l.s4 1966171168
    %v199 = vunpack.c.0.s8 %v198
    %v200 = vlaneseq
    %v201 = vshrl.u32 %v200, 7
    %v202 = vsub.s32 %v199, %v201
    %v203 = vrot.slane %v175, %v202
    %v204 = vcombine.high %v182, %v182
    %v205 = vcombine.high %v189, %v189
    %v206 = vcombine.high %v196, %v196
    %v207 = vcombine.high %v203, %v203
    %v344 = vunpack.c.l.b16 %v23
    %v345 = vunpack.c.l.b16 %v24
    %v346 = vunpack.c.l.b16 %v25
    %v347 = vunpack.c.l.b16 %v26
    %v348 = vunpack.c.l.b16 %v27
    %v349 = vunpack.c.l.b16 %v28
    %v350 = vunpack.c.l.b16 %v29
    %v351 = vunpack.c.l.b16 %v30
    %v352 = vunpack.c.l.b16 %v31
    %v353 = vunpack.c.l.b16 %v32
    %v354 = vunpack.c.l.b16 %v33
    %v355 = vunpack.c.l.b16 %v34
    %v356 = vunpack.c.l.b16 %v35
    %v357 = vunpack.c.l.b16 %v36
    %v358 = vunpack.c.l.b16 %v37
    %v359 = vunpack.c.l.b16 %v38
    %v360 = vunpack.c.l.b16 %v39
    %v361 = vunpack.c.l.b16 %v40
    %v362 = vunpack.c.l.b16 %v41
    %v363 = vunpack.c.l.b16 %v42
    %v364 = vunpack.c.l.b16 %v43
    %v365 = vunpack.c.l.b16 %v44
    %v366 = vunpack.c.l.b16 %v45
    %v367 = vunpack.c.l.b16 %v46
    %v368 = vunpack.c.l.b16 %v47
    %v369 = vunpack.c.l.b16 %v48
    %v370 = vunpack.c.l.b16 %v49
    %v371 = vunpack.c.l.b16 %v50
    %v372 = vunpack.c.l.b16 %v51
    %v373 = vunpack.c.l.b16 %v52
    %v374 = vunpack.c.l.b16 %v53
    %v375 = vunpack.c.l.b16 %v54
    %v376 = vunpack.c.l.b16 %v55
    %v377 = vunpack.c.l.b16 %v56
    %v378 = vunpack.c.l.b16 %v57
    %v379 = vunpack.c.l.b16 %v58
    %v380 = vunpack.c.l.b16 %v59
    %v381 = vunpack.c.l.b16 %v60
    %v382 = vunpack.c.l.b16 %v61
    %v383 = vunpack.c.l.b16 %v62
    %v384 = vunpack.c.l.b16 %v63
    %v385 = vunpack.c.l.b16 %v64
    %v386 = vunpack.c.l.b16 %v65
    %v387 = vunpack.c.l.b16 %v66
    %v388 = vunpack.c.l.b16 %v67
    %v389 = vunpack.c.l.b16 %v68
    %v390 = vunpack.c.l.b16 %v69
    %v391 = vunpack.c.l.b16 %v70
    %v392 = vunpack.c.l.b16 %v71
    %v393 = vunpack.c.l.b16 %v72
    %v394 = vunpack.c.l.b16 %v73
    %v395 = vunpack.c.l.b16 %v74
    %v396 = vunpack.c.l.b16 %v75
    %v397 = vunpack.c.l.b16 %v76
    %v398 = vunpack.c.l.b16 %v77
    %v399 = vunpack.c.l.b16 %v78
    %v400 = vunpack.c.l.b16 %v79
    %v401 = vunpack.c.l.b16 %v80
    %v402 = vunpack.c.l.b16 %v81
    %v403 = vunpack.c.l.b16 %v82
    %v404 = vunpack.c.l.b16 %v83
    %v405 = vunpack.c.l.b16 %v84
    %v406 = vunpack.c.l.b16 %v85
    %v407 = vunpack.c.l.b16 %v86
    %v408 = vunpack.c.l.b16 %v87
    %v409 = vunpack.c.l.b16 %v88
    %v410 = vunpack.c.l.b16 %v89
    %v411 = vunpack.c.l.b16 %v90
    %v412 = vunpack.c.l.b16 %v91
    %v413 = vunpack.c.l.b16 %v92
    %v414 = vunpack.c.l.b16 %v93
    %v415 = vunpack.c.l.b16 %v94
    %v416 = vunpack.c.l.b16 %v95
    %v417 = vunpack.c.l.b16 %v96
    %v418 = vunpack.c.l.b16 %v97
    %v419 = vunpack.c.l.b16 %v98
    %v420 = vunpack.c.l.b16 %v99
    %v421 = vunpack.c.l.b16 %v100
    %v422 = vunpack.c.l.b16 %v101
    %v423 = vunpack.c.l.b16 %v102
    %v424 = vunpack.c.l.b16 %v103
    %v425 = vunpack.c.l.b16 %v104
    %v426 = vunpack.c.l.b16 %v105
    %v427 = vunpack.c.l.b16 %v106
    %v428 = vunpack.c.l.b16 %v107
    %v429 = vunpack.c.l.b16 %v108
    %v430 = vunpack.c.l.b16 %v109
    %v431 = vunpack.c.l.b16 %v110
    %v432 = vunpack.c.l.b16 %v111
    %v433 = vunpack.c.l.b16 %v112
    %v434 = vunpack.c.l.b16 %v113
    %v435 = vunpack.c.l.b16 %v114
    %v436 = vunpack.c.l.b16 %v115
    %v437 = vunpack.c.l.b16 %v116
    %v438 = vunpack.c.l.b16 %v117
    %v439 = vunpack.c.l.b16 %v118
    %v440 = vunpack.c.l.b16 %v119
    %v441 = vunpack.c.l.b16 %v120
    %v442 = vunpack.c.l.b16 %v121
    %v443 = vunpack.c.l.b16 %v122
    %v444 = vunpack.c.l.b16 %v123
    %v445 = vunpack.c.l.b16 %v124
    %v446 = vunpack.c.l.b16 %v125
    %v447 = vunpack.c.l.b16 %v126
    %v448 = vunpack.c.l.b16 %v127
    %v449 = vunpack.c.l.b16 %v128
    %v450 = vunpack.c.l.b16 %v129
    %v451 = vunpack.c.l.b16 %v130
    %v452 = vunpack.c.l.b16 %v131
    %v453 = vunpack.c.l.b16 %v132
    %v454 = vunpack.c.l.b16 %v133
    %v455 = vunpack.c.l.b16 %v134
    %v456 = vunpack.c.l.b16 %v135
    %v457 = vunpack.c.l.b16 %v136
    %v458 = vunpack.c.l.b16 %v137
    %v459 = vunpack.c.l.b16 %v138
    %v460 = vunpack.c.l.b16 %v139
    %v461 = vunpack.c.l.b16 %v140
    %v462 = vunpack.c.l.b16 %v141
    %v463 = vunpack.c.l.b16 %v142
    %v464 = vunpack.c.l.b16 %v143
    %v465 = vunpack.c.l.b16 %v144
    %v466 = vunpack.c.l.b16 %v145
    %v467 = vunpack.c.l.b16 %v146
    %v468 = vunpack.c.l.b16 %v147
    %v469 = vunpack.c.l.b16 %v148
    %v470 = vunpack.c.l.b16 %v149
    %v471 = vunpack.c.l.b16 %v150
    %v472 = vpack.c.b16 %v345, %v344
    %v473 = vpack.c.b16 %v347, %v346
    %v474 = vpack.c.b16 %v349, %v348
    %v475 = vpack.c.b16 %v351, %v350
    %v476 = vpack.c.b16 %v353, %v352
    %v477 = vpack.c.b16 %v355, %v354
    %v478 = vpack.c.b16 %v357, %v356
    %v479 = vpack.c.b16 %v359, %v358
    %v480 = vpack.c.b16 %v361, %v360
    %v481 = vpack.c.b16 %v363, %v362
    %v482 = vpack.c.b16 %v365, %v364
    %v483 = vpack.c.b16 %v367, %v366
    %v484 = vpack.c.b16 %v369, %v368
    %v485 = vpack.c.b16 %v371, %v370
    %v486 = vpack.c.b16 %v373, %v372
    %v487 = vpack.c.b16 %v375, %v374
    %v488 = vpack.c.b16 %v377, %v376
    %v489 = vpack.c.b16 %v379, %v378
    %v490 = vpack.c.b16 %v381, %v380
    %v491 = vpack.c.b16 %v383, %v382
    %v492 = vpack.c.b16 %v385, %v384
    %v493 = vpack.c.b16 %v387, %v386
    %v494 = vpack.c.b16 %v389, %v388
    %v495 = vpack.c.b16 %v391, %v390
    %v496 = vpack.c.b16 %v393, %v392
    %v497 = vpack.c.b16 %v395, %v394
    %v498 = vpack.c.b16 %v397, %v396
    %v499 = vpack.c.b16 %v399, %v398
    %v500 = vpack.c.b16 %v401, %v400
    %v501 = vpack.c.b16 %v403, %v402
    %v502 = vpack.c.b16 %v405, %v404
    %v503 = vpack.c.b16 %v407, %v406
    %v504 = vpack.c.b16 %v409, %v408
    %v505 = vpack.c.b16 %v411, %v410
    %v506 = vpack.c.b16 %v413, %v412
    %v507 = vpack.c.b16 %v415, %v414
    %v508 = vpack.c.b16 %v417, %v416
    %v509 = vpack.c.b16 %v419, %v418
    %v510 = vpack.c.b16 %v421, %v420
    %v511 = vpack.c.b16 %v423, %v422
    %v512 = vpack.c.b16 %v425, %v424
    %v513 = vpack.c.b16 %v427, %v426
    %v514 = vpack.c.b16 %v429, %v428
    %v515 = vpack.c.b16 %v431, %v430
    %v516 = vpack.c.b16 %v433, %v432
    %v517 = vpack.c.b16 %v435, %v434
    %v518 = vpack.c.b16 %v437, %v436
    %v519 = vpack.c.b16 %v439, %v438
    %v520 = vpack.c.b16 %v441, %v440
    %v521 = vpack.c.b16 %v443, %v442
    %v522 = vpack.c.b16 %v445, %v444
    %v523 = vpack.c.b16 %v447, %v446
    %v524 = vpack.c.b16 %v449, %v448
    %v525 = vpack.c.b16 %v451, %v450
    %v526 = vpack.c.b16 %v453, %v452
    %v527 = vpack.c.b16 %v455, %v454
    %v528 = vpack.c.b16 %v457, %v456
    %v529 = vpack.c.b16 %v459, %v458
    %v530 = vpack.c.b16 %v461, %v460
    %v531 = vpack.c.b16 %v463, %v462
    %v532 = vpack.c.b16 %v465, %v464
    %v533 = vpack.c.b16 %v467, %v466
    %v534 = vpack.c.b16 %v469, %v468
    %v535 = vpack.c.b16 %v471, %v470
    %600 = vmatprep.subr.bf16.mxu0 0
    %601 = vmatpush1.bf16.msra.mxu0 %v472
    %602 = vmatprep.subr.bf16.mxu0 0
    %603 = vmatpush1.bf16.msra.mxu0 %v473
    %604 = vmatprep.subr.bf16.mxu0 0
    %605 = vmatpush1.bf16.msra.mxu0 %v474
    %606 = vmatprep.subr.bf16.mxu0 0
    %607 = vmatpush1.bf16.msra.mxu0 %v475
    %608 = vmatprep.subr.bf16.mxu0 0
    %609 = vmatpush1.bf16.msra.mxu0 %v476
    %610 = vmatprep.subr.bf16.mxu0 0
    %611 = vmatpush1.bf16.msra.mxu0 %v477
    %612 = vmatprep.subr.bf16.mxu0 0
    %613 = vmatpush1.bf16.msra.mxu0 %v478
    %614 = vmatprep.subr.bf16.mxu0 0
    %615 = vmatpush1.bf16.msra.mxu0 %v479
    %616 = vmatprep.subr.bf16.mxu0 0
    %617 = vmatpush1.bf16.msra.mxu0 %v480
    %618 = vmatprep.subr.bf16.mxu0 0
    %619 = vmatpush1.bf16.msra.mxu0 %v481
    %620 = vmatprep.subr.bf16.mxu0 0
    %621 = vmatpush1.bf16.msra.mxu0 %v482
    %622 = vmatprep.subr.bf16.mxu0 0
    %623 = vmatpush1.bf16.msra.mxu0 %v483
    %624 = vmatprep.subr.bf16.mxu0 0
    %625 = vmatpush1.bf16.msra.mxu0 %v484
    %626 = vmatprep.subr.bf16.mxu0 0
    %627 = vmatpush1.bf16.msra.mxu0 %v485
    %628 = vmatprep.subr.bf16.mxu0 0
    %629 = vmatpush1.bf16.msra.mxu0 %v486
    %630 = vmatprep.subr.bf16.mxu0 0
    %631 = vmatpush1.bf16.msra.mxu0 %v487
    %632 = vmatprep.mubr.bf16.mxu0 %v196
    %633 = vmatmul.mubr.bf16.gmra.mrb[0].mxu0 %v182
    %v634 = vpop.f32.mrb[0].mxu0
    %v635 = vadd.f32 %v156, %v634
    %v636 = vpop.f32.mrb[0].mxu0
    %v637 = vpop.f32.mrb[0].mxu0
    %v638 = vpop.f32.mrb[0].mxu0
    %639 = vdwg.mxu0
    %640 = vmatprep.subr.bf16.mxu0 0
    %641 = vmatpush1.bf16.msra.mxu0 %v488
    %642 = vmatprep.subr.bf16.mxu0 0
    %643 = vmatpush1.bf16.msra.mxu0 %v489
    %644 = vmatprep.subr.bf16.mxu0 0
    %645 = vmatpush1.bf16.msra.mxu0 %v490
    %646 = vmatprep.subr.bf16.mxu0 0
    %647 = vmatpush1.bf16.msra.mxu0 %v491
    %648 = vmatprep.subr.bf16.mxu0 0
    %649 = vmatpush1.bf16.msra.mxu0 %v492
    %650 = vmatprep.subr.bf16.mxu0 0
    %651 = vmatpush1.bf16.msra.mxu0 %v493
    %652 = vmatprep.subr.bf16.mxu0 0
    %653 = vmatpush1.bf16.msra.mxu0 %v494
    %654 = vmatprep.subr.bf16.mxu0 0
    %655 = vmatpush1.bf16.msra.mxu0 %v495
    %656 = vmatprep.subr.bf16.mxu0 0
    %657 = vmatpush1.bf16.msra.mxu0 %v496
    %658 = vmatprep.subr.bf16.mxu0 0
    %659 = vmatpush1.bf16.msra.mxu0 %v497
    %660 = vmatprep.subr.bf16.mxu0 0
    %661 = vmatpush1.bf16.msra.mxu0 %v498
    %662 = vmatprep.subr.bf16.mxu0 0
    %663 = vmatpush1.bf16.msra.mxu0 %v499
    %664 = vmatprep.subr.bf16.mxu0 0
    %665 = vmatpush1.bf16.msra.mxu0 %v500
    %666 = vmatprep.subr.bf16.mxu0 0
    %667 = vmatpush1.bf16.msra.mxu0 %v501
    %668 = vmatprep.subr.bf16.mxu0 0
    %669 = vmatpush1.bf16.msra.mxu0 %v502
    %670 = vmatprep.subr.bf16.mxu0 0
    %671 = vmatpush1.bf16.msra.mxu0 %v503
    %672 = vmatprep.mubr.bf16.mxu0 %v206
    %673 = vmatmul.mubr.bf16.gmra.mrb[0].mxu0 %v204
    %v674 = vpop.f32.mrb[0].mxu0
    %v675 = vadd.f32 %v635, %v674
    %v676 = vpop.f32.mrb[0].mxu0
    %v677 = vpop.f32.mrb[0].mxu0
    %v678 = vpop.f32.mrb[0].mxu0
    %679 = vdwg.mxu0
    %680 = vmatprep.subr.bf16.mxu0 0
    %681 = vmatpush1.bf16.msra.mxu0 %v504
    %682 = vmatprep.subr.bf16.mxu0 0
    %683 = vmatpush1.bf16.msra.mxu0 %v505
    %684 = vmatprep.subr.bf16.mxu0 0
    %685 = vmatpush1.bf16.msra.mxu0 %v506
    %686 = vmatprep.subr.bf16.mxu0 0
    %687 = vmatpush1.bf16.msra.mxu0 %v507
    %688 = vmatprep.subr.bf16.mxu0 0
    %689 = vmatpush1.bf16.msra.mxu0 %v508
    %690 = vmatprep.subr.bf16.mxu0 0
    %691 = vmatpush1.bf16.msra.mxu0 %v509
    %692 = vmatprep.subr.bf16.mxu0 0
    %693 = vmatpush1.bf16.msra.mxu0 %v510
    %694 = vmatprep.subr.bf16.mxu0 0
    %695 = vmatpush1.bf16.msra.mxu0 %v511
    %696 = vmatprep.subr.bf16.mxu0 0
    %697 = vmatpush1.bf16.msra.mxu0 %v512
    %698 = vmatprep.subr.bf16.mxu0 0
    %699 = vmatpush1.bf16.msra.mxu0 %v513
    %700 = vmatprep.subr.bf16.mxu0 0
    %701 = vmatpush1.bf16.msra.mxu0 %v514
    %702 = vmatprep.subr.bf16.mxu0 0
    %703 = vmatpush1.bf16.msra.mxu0 %v515
    %704 = vmatprep.subr.bf16.mxu0 0
    %705 = vmatpush1.bf16.msra.mxu0 %v516
    %706 = vmatprep.subr.bf16.mxu0 0
    %707 = vmatpush1.bf16.msra.mxu0 %v517
    %708 = vmatprep.subr.bf16.mxu0 0
    %709 = vmatpush1.bf16.msra.mxu0 %v518
    %710 = vmatprep.subr.bf16.mxu0 0
    %711 = vmatpush1.bf16.msra.mxu0 %v519
    %712 = vmatprep.mubr.bf16.mxu0 %v203
    %713 = vmatmul.mubr.bf16.gmra.mrb[0].mxu0 %v189
    %v714 = vpop.f32.mrb[0].mxu0
    %v715 = vadd.f32 %v675, %v714
    %v716 = vpop.f32.mrb[0].mxu0
    %v717 = vpop.f32.mrb[0].mxu0
    %v718 = vpop.f32.mrb[0].mxu0
    %719 = vdwg.mxu0
    %720 = vmatprep.subr.bf16.mxu0 0
    %721 = vmatpush1.bf16.msra.mxu0 %v520
    %722 = vmatprep.subr.bf16.mxu0 0
    %723 = vmatpush1.bf16.msra.mxu0 %v521
    %724 = vmatprep.subr.bf16.mxu0 0
    %725 = vmatpush1.bf16.msra.mxu0 %v522
    %726 = vmatprep.subr.bf16.mxu0 0
    %727 = vmatpush1.bf16.msra.mxu0 %v523
    %728 = vmatprep.subr.bf16.mxu0 0
    %729 = vmatpush1.bf16.msra.mxu0 %v524
    %730 = vmatprep.subr.bf16.mxu0 0
    %731 = vmatpush1.bf16.msra.mxu0 %v525
    %732 = vmatprep.subr.bf16.mxu0 0
    %733 = vmatpush1.bf16.msra.mxu0 %v526
    %734 = vmatprep.subr.bf16.mxu0 0
    %735 = vmatpush1.bf16.msra.mxu0 %v527
    %736 = vmatprep.subr.bf16.mxu0 0
    %737 = vmatpush1.bf16.msra.mxu0 %v528
    %738 = vmatprep.subr.bf16.mxu0 0
    %739 = vmatpush1.bf16.msra.mxu0 %v529
    %740 = vmatprep.subr.bf16.mxu0 0
    %741 = vmatpush1.bf16.msra.mxu0 %v530
    %742 = vmatprep.subr.bf16.mxu0 0
    %743 = vmatpush1.bf16.msra.mxu0 %v531
    %744 = vmatprep.subr.bf16.mxu0 0
    %745 = vmatpush1.bf16.msra.mxu0 %v532
    %746 = vmatprep.subr.bf16.mxu0 0
    %747 = vmatpush1.bf16.msra.mxu0 %v533
    %748 = vmatprep.subr.bf16.mxu0 0
    %749 = vmatpush1.bf16.msra.mxu0 %v534
    %750 = vmatprep.subr.bf16.mxu0 0
    %751 = vmatpush1.bf16.msra.mxu0 %v535
    %752 = vmatprep.mubr.bf16.mxu0 %v207
    %753 = vmatmul.mubr.bf16.gmra.mrb[0].mxu0 %v205
    %v754 = vpop.f32.mrb[0].mxu0
    %v755 = vadd.f32 %v715, %v754
    %v756 = vpop.f32.mrb[0].mxu0
    %v757 = vpop.f32.mrb[0].mxu0
    %v758 = vpop.f32.mrb[0].mxu0
    %759 = vdwg.mxu0
    %v760 = vxor.u32 %v755, 2147483648
    %v761 = vmul.f32 %v760, 1.442695
    %v762 = vpow.pop %v761
    %v763 = vadd.f32 %v762, 1.0
    %v764 = vrcp.pop %v763
    %v765 = vmul.f32 1.0, %v764
    %v767 = vrot.slane %v765, 6
    %v769 = vrot.slane %v765, 4
    %v771 = vrot.slane %v765, 2
    %vm773 = vcmask 1041408
    %v774 = vsel %vm773, %v765, %v767
    %vm775 = vcmask 1043456
    %v776 = vsel %vm775, %v774, %v769
    %vm777 = vcmask 1045504
    %v778 = vsel %vm777, %v776, %v771
    %v779 = vlaneseq
    %v780 = vshrl.u32 %v779, 7
    %v781 = vadd.s32 %v780, 8
    %v782 = vcvt.s32.f32 %v780
    %v783 = vcvt.s32.f32 %v781
    %v784 = vadd.f32 %v782, 0.5
    %v785 = vadd.f32 %v783, 0.5
    %v786 = vrcp.pop 2.0
    %v787 = vmul.f32 %v784, %v786
    %v788 = vmul.f32 %v785, %v786
    %v789 = vfloor.f32 %v787
    %v790 = vfloor.f32 %v788
    %v791 = vadd.f32 %v789, 1.0
    %v792 = vadd.f32 %v790, 1.0
    %v793 = vmul.f32 %v791, %v778
    %v794 = vmul.f32 %v792, %v778
    %v795 = vfloor.f32 %v793
    %v796 = vfloor.f32 %v794
    %v797 = vmul.f32 %v789, %v778
    %v798 = vmul.f32 %v790, %v778
    %v799 = vfloor.f32 %v797
    %v800 = vfloor.f32 %v798
    %v801 = vsub.f32 %v795, %v799
    %v802 = vsub.f32 %v796, %v800
    %v803 = vld [vmem:[%s3] sm:$0xff]
    %v804 = vld [vmem:[%s3 + $0x8] sm:$0xff]
    %v805 = vld [vmem:[%s3 + $0x10] sm:$0xff]
    %v806 = vld [vmem:[%s3 + $0x18] sm:$0xff]
    %v807 = vld [vmem:[%s4] sm:$0xff]
    %v808 = vld [vmem:[%s4 + $0x8] sm:$0xff]
    %v809 = vld [vmem:[%s4 + $0x10] sm:$0xff]
    %v810 = vld [vmem:[%s4 + $0x18] sm:$0xff]
    %v811 = vsub.f32 %v803, %v807
    %v812 = vsub.f32 %v804, %v808
    %v813 = vsub.f32 %v805, %v809
    %v814 = vsub.f32 %v806, %v810
    %v815 = vsub.f32 0.0, %v807
    %v816 = vsub.f32 0.0, %v808
    %v817 = vsub.f32 0.0, %v809
    %v818 = vsub.f32 0.0, %v810
    %v819 = vsub.f32 1.0, %v807
    %v820 = vsub.f32 1.0, %v808
    %v821 = vsub.f32 1.0, %v809
    %v822 = vsub.f32 1.0, %v810
    %823 = vst [vmem:[#allocation2] sm:$0x3] 0.0
    %v824 = vpack.c.bf16 %v801, %v801
    %v825 = vpack.c.bf16 %v812, %v811
    %v826 = vpack.c.bf16 %v814, %v813
    %vm827 = vcmask 261120
    %v829 = vsel %vm827, %v824, 0
    %831 = vmatprep.subr.bf16.mxu0 0
    %832 = vmatpush1.bf16.msra.mxu0 %v825
    %833 = vmatprep.subr.bf16.mxu0 0
    %834 = vmatpush1.bf16.msra.mxu0 %v826
    %835 = vmatprep.subr.bf16.mxu0 0
    %836 = vmatpush1.bf16.msra.mxu0 0
    %837 = vmatprep.subr.bf16.mxu0 0
    %838 = vmatpush1.bf16.msra.mxu0 0
    %839 = vmatprep.subr.bf16.mxu0 0
    %840 = vmatpush1.bf16.msra.mxu0 0
    %841 = vmatprep.subr.bf16.mxu0 0
    %842 = vmatpush1.bf16.msra.mxu0 0
    %843 = vmatprep.subr.bf16.mxu0 0
    %844 = vmatpush1.bf16.msra.mxu0 0
    %845 = vmatprep.subr.bf16.mxu0 0
    %846 = vmatpush1.bf16.msra.mxu0 0
    %847 = vmatprep.subr.bf16.mxu0 0
    %848 = vmatpush1.bf16.msra.mxu0 0
    %849 = vmatprep.subr.bf16.mxu0 0
    %850 = vmatpush1.bf16.msra.mxu0 0
    %851 = vmatprep.subr.bf16.mxu0 0
    %852 = vmatpush1.bf16.msra.mxu0 0
    %853 = vmatprep.subr.bf16.mxu0 0
    %854 = vmatpush1.bf16.msra.mxu0 0
    %855 = vmatprep.subr.bf16.mxu0 0
    %856 = vmatpush1.bf16.msra.mxu0 0
    %857 = vmatprep.subr.bf16.mxu0 0
    %858 = vmatpush1.bf16.msra.mxu0 0
    %859 = vmatprep.subr.bf16.mxu0 0
    %860 = vmatpush1.bf16.msra.mxu0 0
    %861 = vmatprep.subr.bf16.mxu0 0
    %862 = vmatpush1.bf16.msra.mxu0 0
    %863 = vmatprep.mubr.bf16.mxu0 0
    %864 = vmatmul.mubr.bf16.gmra.mrb[0].mxu0 %v829
    %v865 = vpop.f32.mrb[0].mxu0
    %v866 = vadd.f32 0.0, %v865
    %v867 = vpop.f32.mrb[0].mxu0
    %v868 = vpop.f32.mrb[0].mxu0
    %v869 = vpop.f32.mrb[0].mxu0
    %870 = vdwg.mxu0
    %vm871 = vcmp.ge.f32.partialorder %v866, 0.5
    %v872 = vsel %vm871, 1, 0
    %v873 = vcvt.s32.f32 %v872
    %v874 = vadd.f32 %v801, 0.0
    %v875 = vadd.f32 %v873, 0.0
    %v876 = vpack.c.bf16 %v874, %v874
    %v877 = vpack.c.bf16 %v873, %v873
    %878 = vxpose.xlu0.c.b16.start [1/8] %v876, 128
    %879 = vxpose.xlu0.c.b16.cont [2/8] 0, 128
    %880 = vxpose.xlu0.c.b16.cont [3/8] 0, 128
    %881 = vxpose.xlu0.c.b16.cont [4/8] 0, 128
    %882 = vxpose.xlu0.c.b16.cont [5/8] 0, 128
    %883 = vxpose.xlu0.c.b16.cont [6/8] 0, 128
    %884 = vxpose.xlu0.c.b16.cont [7/8] 0, 128
    %885 = vxpose.xlu0.c.b16.end [8/8] 0, 128
    %v886 = vpop.trf.xlu0
    %v887 = vpop.trf.xlu0
    %v888 = vpop.trf.xlu0
    %v889 = vpop.trf.xlu0
    %v890 = vpop.trf.xlu0
    %v891 = vpop.trf.xlu0
    %v892 = vpop.trf.xlu0
    %v893 = vpop.trf.xlu0
    %vm894 = vcmask 15360
    %v896 = vsel %vm894, %v886, 0
    %v899 = vsel %vm894, %v887, 0
    %vm901 = vcmask 1040384
    %v903 = vsel %vm901, %v877, 0
    %905 = vmatprep.subr.bf16.mxu0 0
    %906 = vmatpush1.bf16.msra.mxu0 %v903
    %907 = vmatprep.subr.bf16.mxu0 0
    %908 = vmatpush1.bf16.msra.mxu0 0
    %909 = vmatprep.subr.bf16.mxu0 0
    %910 = vmatpush1.bf16.msra.mxu0 0
    %911 = vmatprep.subr.bf16.mxu0 0
    %912 = vmatpush1.bf16.msra.mxu0 0
    %913 = vmatprep.subr.bf16.mxu0 0
    %914 = vmatpush1.bf16.msra.mxu0 0
    %915 = vmatprep.subr.bf16.mxu0 0
    %916 = vmatpush1.bf16.msra.mxu0 0
    %917 = vmatprep.subr.bf16.mxu0 0
    %918 = vmatpush1.bf16.msra.mxu0 0
    %919 = vmatprep.subr.bf16.mxu0 0
    %920 = vmatpush1.bf16.msra.mxu0 0
    %921 = vmatprep.subr.bf16.mxu0 0
    %922 = vmatpush1.bf16.msra.mxu0 0
    %923 = vmatprep.subr.bf16.mxu0 0
    %924 = vmatpush1.bf16.msra.mxu0 0
    %925 = vmatprep.subr.bf16.mxu0 0
    %926 = vmatpush1.bf16.msra.mxu0 0
    %927 = vmatprep.subr.bf16.mxu0 0
    %928 = vmatpush1.bf16.msra.mxu0 0
    %929 = vmatprep.subr.bf16.mxu0 0
    %930 = vmatpush1.bf16.msra.mxu0 0
    %931 = vmatprep.subr.bf16.mxu0 0
    %932 = vmatpush1.bf16.msra.mxu0 0
    %933 = vmatprep.subr.bf16.mxu0 0
    %934 = vmatpush1.bf16.msra.mxu0 0
    %935 = vmatprep.subr.bf16.mxu0 0
    %936 = vmatpush1.bf16.msra.mxu0 0
    %937 = vmatprep.mubr.bf16.mxu0 0
    %938 = vmatmul.mubr.bf16.gmra.mrb[0].mxu0 %v896
    %v939 = vpop.f32.mrb[0].mxu0
    %v940 = vadd.f32 0.0, %v939
    %v941 = vpop.f32.mrb[0].mxu0
    %v942 = vpop.f32.mrb[0].mxu0
    %v943 = vadd.f32 0.0, %v942
    %v944 = vpop.f32.mrb[0].mxu0
    %945 = vmatprep.mubr.bf16.mxu0 0
    %946 = vmatmul.mubr.bf16.gmra.mrb[0].mxu0 %v899
    %v947 = vpop.f32.mrb[0].mxu0
    %v948 = vadd.f32 0.0, %v947
    %v949 = vpop.f32.mrb[0].mxu0
    %v950 = vpop.f32.mrb[0].mxu0
    %v951 = vadd.f32 0.0, %v950
    %v952 = vpop.f32.mrb[0].mxu0
    %953 = vdwg.mxu0
    %v954 = vpack.c.bf16 %v875, %v875
    %955 = vxpose.xlu0.c.b16.start [1/8] %v824, 128
    %956 = vxpose.xlu0.c.b16.cont [2/8] 0, 128
    %957 = vxpose.xlu0.c.b16.cont [3/8] 0, 128
    %958 = vxpose.xlu0.c.b16.cont [4/8] 0, 128
    %959 = vxpose.xlu0.c.b16.cont [5/8] 0, 128
    %960 = vxpose.xlu0.c.b16.cont [6/8] 0, 128
    %961 = vxpose.xlu0.c.b16.cont [7/8] 0, 128
    %962 = vxpose.xlu0.c.b16.end [8/8] 0, 128
    %v963 = vpop.trf.xlu0
    %v964 = vpop.trf.xlu0
    %v965 = vpop.trf.xlu0
    %v966 = vpop.trf.xlu0
    %v967 = vpop.trf.xlu0
    %v968 = vpop.trf.xlu0
    %v969 = vpop.trf.xlu0
    %v970 = vpop.trf.xlu0
    %v972 = vsel %vm894, %v963, 0
    %v975 = vsel %vm894, %v964, 0
    %v978 = vsel %vm901, %v954, 0
    %980 = vmatprep.subr.bf16.mxu0 0
    %981 = vmatpush1.bf16.msra.mxu0 %v978
    %982 = vmatprep.subr.bf16.mxu0 0
    %983 = vmatpush1.bf16.msra.mxu0 0
    %984 = vmatprep.subr.bf16.mxu0 0
    %985 = vmatpush1.bf16.msra.mxu0 0
    %986 = vmatprep.subr.bf16.mxu0 0
    %987 = vmatpush1.bf16.msra.mxu0 0
    %988 = vmatprep.subr.bf16.mxu0 0
    %989 = vmatpush1.bf16.msra.mxu0 0
    %990 = vmatprep.subr.bf16.mxu0 0
    %991 = vmatpush1.bf16.msra.mxu0 0
    %992 = vmatprep.subr.bf16.mxu0 0
    %993 = vmatpush1.bf16.msra.mxu0 0
    %994 = vmatprep.subr.bf16.mxu0 0
    %995 = vmatpush1.bf16.msra.mxu0 0
    %996 = vmatprep.subr.bf16.mxu0 0
    %997 = vmatpush1.bf16.msra.mxu0 0
    %998 = vmatprep.subr.bf16.mxu0 0
    %999 = vmatpush1.bf16.msra.mxu0 0
    %1000 = vmatprep.subr.bf16.mxu0 0
    %1001 = vmatpush1.bf16.msra.mxu0 0
    %1002 = vmatprep.subr.bf16.mxu0 0
    %1003 = vmatpush1.bf16.msra.mxu0 0
    %1004 = vmatprep.subr.bf16.mxu0 0
    %1005 = vmatpush1.bf16.msra.mxu0 0
    %1006 = vmatprep.subr.bf16.mxu0 0
    %1007 = vmatpush1.bf16.msra.mxu0 0
    %1008 = vmatprep.subr.bf16.mxu0 0
    %1009 = vmatpush1.bf16.msra.mxu0 0
    %1010 = vmatprep.subr.bf16.mxu0 0
    %1011 = vmatpush1.bf16.msra.mxu0 0
    %1012 = vmatprep.mubr.bf16.mxu0 0
    %1013 = vmatmul.mubr.bf16.gmra.mrb[0].mxu0 %v972
    %v1014 = vpop.f32.mrb[0].mxu0
    %v1015 = vadd.f32 0.0, %v1014
    %v1016 = vpop.f32.mrb[0].mxu0
    %v1017 = vpop.f32.mrb[0].mxu0
    %v1018 = vadd.f32 0.0, %v1017
    %v1019 = vpop.f32.mrb[0].mxu0
    %1020 = vmatprep.mubr.bf16.mxu0 0
    %1021 = vmatmul.mubr.bf16.gmra.mrb[0].mxu0 %v975
    %v1022 = vpop.f32.mrb[0].mxu0
    %v1023 = vadd.f32 0.0, %v1022
    %v1024 = vpop.f32.mrb[0].mxu0
    %v1025 = vpop.f32.mrb[0].mxu0
    %v1026 = vadd.f32 0.0, %v1025
    %v1027 = vpop.f32.mrb[0].mxu0
    %1028 = vdwg.mxu0
    %v1029 = vsub.f32 %v940, %v1015
    %v1030 = vsub.f32 %v943, %v1018
    %v1031 = vsub.f32 %v948, %v1023
    %v1032 = vsub.f32 %v951, %v1026
    %v1033 = vmul.f32 %v1029, 0.001
    %v1034 = vmul.f32 %v1030, 0.001
    %v1035 = vmul.f32 %v1031, 0.001
    %v1036 = vmul.f32 %v1032, 0.001
    %v1037 = vadd.f32 %v811, %v1033
    %v1038 = vadd.f32 %v812, %v1034
    %v1039 = vadd.f32 %v813, %v1035
    %v1040 = vadd.f32 %v814, %v1036
    %v1041 = vmax.f32 %v815, %v1037
    %v1042 = vmax.f32 %v816, %v1038
    %v1043 = vmax.f32 %v817, %v1039
    %v1044 = vmax.f32 %v818, %v1040
    %v1045 = vmin.f32 %v819, %v1041
    %v1046 = vmin.f32 %v820, %v1042
    %v1047 = vmin.f32 %v821, %v1043
    %v1048 = vmin.f32 %v822, %v1044
    %v1049 = vpack.c.bf16 %v1046, %v1045
    %v1050 = vpack.c.bf16 %v1048, %v1047
    %v1052 = vrot.slane %v824, 1
    %v1054 = vsel %vm827, %v1052, 0
    %1056 = vmatprep.subr.bf16.mxu0 0
    %1057 = vmatpush1.bf16.msra.mxu0 %v1049
    %1058 = vmatprep.subr.bf16.mxu0 0
    %1059 = vmatpush1.bf16.msra.mxu0 %v1050
    %1060 = vmatprep.subr.bf16.mxu0 0
    %1061 = vmatpush1.bf16.msra.mxu0 0
    %1062 = vmatprep.subr.bf16.mxu0 0
    %1063 = vmatpush1.bf16.msra.mxu0 0
    %1064 = vmatprep.subr.bf16.mxu0 0
    %1065 = vmatpush1.bf16.msra.mxu0 0
    %1066 = vmatprep.subr.bf16.mxu0 0
    %1067 = vmatpush1.bf16.msra.mxu0 0
    %1068 = vmatprep.subr.bf16.mxu0 0
    %1069 = vmatpush1.bf16.msra.mxu0 0
    %1070 = vmatprep.subr.bf16.mxu0 0
    %1071 = vmatpush1.bf16.msra.mxu0 0
    %1072 = vmatprep.subr.bf16.mxu0 0
    %1073 = vmatpush1.bf16.msra.mxu0 0
    %1074 = vmatprep.subr.bf16.mxu0 0
    %1075 = vmatpush1.bf16.msra.mxu0 0
    %1076 = vmatprep.subr.bf16.mxu0 0
    %1077 = vmatpush1.bf16.msra.mxu0 0
    %1078 = vmatprep.subr.bf16.mxu0 0
    %1079 = vmatpush1.bf16.msra.mxu0 0
    %1080 = vmatprep.subr.bf16.mxu0 0
    %1081 = vmatpush1.bf16.msra.mxu0 0
    %1082 = vmatprep.subr.bf16.mxu0 0
    %1083 = vmatpush1.bf16.msra.mxu0 0
    %1084 = vmatprep.subr.bf16.mxu0 0
    %1085 = vmatpush1.bf16.msra.mxu0 0
    %1086 = vmatprep.subr.bf16.mxu0 0
    %1087 = vmatpush1.bf16.msra.mxu0 0
    %1088 = vmatprep.mubr.bf16.mxu0 0
    %1089 = vmatmul.mubr.bf16.gmra.mrb[0].mxu0 %v1054
    %v1090 = vpop.f32.mrb[0].mxu0
    %v1091 = vadd.f32 0.0, %v1090
    %v1092 = vpop.f32.mrb[0].mxu0
    %v1093 = vpop.f32.mrb[0].mxu0
    %v1094 = vpop.f32.mrb[0].mxu0
    %1095 = vdwg.mxu0
    %v1096 = vmul.f32 %v866, 0.9
    %v1097 = vsub.f32 1.0, %v873
    %v1098 = vmul.f32 %v1096, %v1097
    %v1099 = vadd.f32 %v1098, %v1091
    %vm1100 = vcmp.ge.f32.partialorder %v1099, 0.5
    %v1101 = vsel %vm1100, 1, 0
    %v1102 = vcvt.s32.f32 %v1101
    %v1103 = vmul.f32 %v874, 0.95122945
    %v1105 = vrot.slane %v801, 2
    %v1107 = vadd.f32 %v1103, %v1105
    %v1108 = vmul.f32 %v875, 0.95122945
    %v1109 = vadd.f32 %v1108, %v1102
    %v1110 = vpack.c.bf16 %v1107, %v1107
    %v1111 = vpack.c.bf16 %v1102, %v1102
    %1112 = vxpose.xlu0.c.b16.start [1/8] %v1110, 128
    %1113 = vxpose.xlu0.c.b16.cont [2/8] 0, 128
    %1114 = vxpose.xlu0.c.b16.cont [3/8] 0, 128
    %1115 = vxpose.xlu0.c.b16.cont [4/8] 0, 128
    %1116 = vxpose.xlu0.c.b16.cont [5/8] 0, 128
    %1117 = vxpose.xlu0.c.b16.cont [6/8] 0, 128
    %1118 = vxpose.xlu0.c.b16.cont [7/8] 0, 128
    %1119 = vxpose.xlu0.c.b16.end [8/8] 0, 128
    %v1120 = vpop.trf.xlu0
    %v1121 = vpop.trf.xlu0
    %v1122 = vpop.trf.xlu0
    %v1123 = vpop.trf.xlu0
    %v1124 = vpop.trf.xlu0
    %v1125 = vpop.trf.xlu0
    %v1126 = vpop.trf.xlu0
    %v1127 = vpop.trf.xlu0
    %v1129 = vsel %vm894, %v1120, 0
    %v1132 = vsel %vm894, %v1121, 0
    %v1135 = vsel %vm901, %v1111, 0
    %1137 = vmatprep.subr.bf16.mxu0 0
    %1138 = vmatpush1.bf16.msra.mxu0 %v1135
    %1139 = vmatprep.subr.bf16.mxu0 0
    %1140 = vmatpush1.bf16.msra.mxu0 0
    %1141 = vmatprep.subr.bf16.mxu0 0
    %1142 = vmatpush1.bf16.msra.mxu0 0
    %1143 = vmatprep.subr.bf16.mxu0 0
    %1144 = vmatpush1.bf16.msra.mxu0 0
    %1145 = vmatprep.subr.bf16.mxu0 0
    %1146 = vmatpush1.bf16.msra.mxu0 0
    %1147 = vmatprep.subr.bf16.mxu0 0
    %1148 = vmatpush1.bf16.msra.mxu0 0
    %1149 = vmatprep.subr.bf16.mxu0 0
    %1150 = vmatpush1.bf16.msra.mxu0 0
    %1151 = vmatprep.subr.bf16.mxu0 0
    %1152 = vmatpush1.bf16.msra.mxu0 0
    %1153 = vmatprep.subr.bf16.mxu0 0
    %1154 = vmatpush1.bf16.msra.mxu0 0
    %1155 = vmatprep.subr.bf16.mxu0 0
    %1156 = vmatpush1.bf16.msra.mxu0 0
    %1157 = vmatprep.subr.bf16.mxu0 0
    %1158 = vmatpush1.bf16.msra.mxu0 0
    %1159 = vmatprep.subr.bf16.mxu0 0
    %1160 = vmatpush1.bf16.msra.mxu0 0
    %1161 = vmatprep.subr.bf16.mxu0 0
    %1162 = vmatpush1.bf16.msra.mxu0 0
    %1163 = vmatprep.subr.bf16.mxu0 0
    %1164 = vmatpush1.bf16.msra.mxu0 0
    %1165 = vmatprep.subr.bf16.mxu0 0
    %1166 = vmatpush1.bf16.msra.mxu0 0
    %1167 = vmatprep.subr.bf16.mxu0 0
    %1168 = vmatpush1.bf16.msra.mxu0 0
    %1169 = vmatprep.mubr.bf16.mxu0 0
    %1170 = vmatmul.mubr.bf16.gmra.mrb[0].mxu0 %v1129
    %v1171 = vpop.f32.mrb[0].mxu0
    %v1172 = vadd.f32 0.0, %v1171
    %v1173 = vpop.f32.mrb[0].mxu0
    %v1174 = vpop.f32.mrb[0].mxu0
    %v1175 = vadd.f32 0.0, %v1174
    %v1176 = vpop.f32.mrb[0].mxu0
    %1177 = vmatprep.mubr.bf16.mxu0 0
    %1178 = vmatmul.mubr.bf16.gmra.mrb[0].mxu0 %v1132
    %v1179 = vpop.f32.mrb[0].mxu0
    %v1180 = vadd.f32 0.0, %v1179
    %v1181 = vpop.f32.mrb[0].mxu0
    %v1182 = vpop.f32.mrb[0].mxu0
    %v1183 = vadd.f32 0.0, %v1182
    %v1184 = vpop.f32.mrb[0].mxu0
    %1185 = vdwg.mxu0
    %v1186 = vpack.c.bf16 %v1109, %v1109
    %1188 = vxpose.xlu0.c.b16.start [1/8] %v1052, 128
    %1189 = vxpose.xlu0.c.b16.cont [2/8] 0, 128
    %1190 = vxpose.xlu0.c.b16.cont [3/8] 0, 128
    %1191 = vxpose.xlu0.c.b16.cont [4/8] 0, 128
    %1192 = vxpose.xlu0.c.b16.cont [5/8] 0, 128
    %1193 = vxpose.xlu0.c.b16.cont [6/8] 0, 128
    %1194 = vxpose.xlu0.c.b16.cont [7/8] 0, 128
    %1195 = vxpose.xlu0.c.b16.end [8/8] 0, 128
    %v1196 = vpop.trf.xlu0
    %v1197 = vpop.trf.xlu0
    %v1198 = vpop.trf.xlu0
    %v1199 = vpop.trf.xlu0
    %v1200 = vpop.trf.xlu0
    %v1201 = vpop.trf.xlu0
    %v1202 = vpop.trf.xlu0
    %v1203 = vpop.trf.xlu0
    %v1205 = vsel %vm894, %v1196, 0
    %v1208 = vsel %vm894, %v1197, 0
    %v1211 = vsel %vm901, %v1186, 0
    %1213 = vmatprep.subr.bf16.mxu0 0
    %1214 = vmatpush1.bf16.msra.mxu0 %v1211
    %1215 = vmatprep.subr.bf16.mxu0 0
    %1216 = vmatpush1.bf16.msra.mxu0 0
    %1217 = vmatprep.subr.bf16.mxu0 0
    %1218 = vmatpush1.bf16.msra.mxu0 0
    %1219 = vmatprep.subr.bf16.mxu0 0
    %1220 = vmatpush1.bf16.msra.mxu0 0
    %1221 = vmatprep.subr.bf16.mxu0 0
    %1222 = vmatpush1.bf16.msra.mxu0 0
    %1223 = vmatprep.subr.bf16.mxu0 0
    %1224 = vmatpush1.bf16.msra.mxu0 0
    %1225 = vmatprep.subr.bf16.mxu0 0
    %1226 = vmatpush1.bf16.msra.mxu0 0
    %1227 = vmatprep.subr.bf16.mxu0 0
    %1228 = vmatpush1.bf16.msra.mxu0 0
    %1229 = vmatprep.subr.bf16.mxu0 0
    %1230 = vmatpush1.bf16.msra.mxu0 0
    %1231 = vmatprep.subr.bf16.mxu0 0
    %1232 = vmatpush1.bf16.msra.mxu0 0
    %1233 = vmatprep.subr.bf16.mxu0 0
    %1234 = vmatpush1.bf16.msra.mxu0 0
    %1235 = vmatprep.subr.bf16.mxu0 0
    %1236 = vmatpush1.bf16.msra.mxu0 0
    %1237 = vmatprep.subr.bf16.mxu0 0
    %1238 = vmatpush1.bf16.msra.mxu0 0
    %1239 = vmatprep.subr.bf16.mxu0 0
    %1240 = vmatpush1.bf16.msra.mxu0 0
    %1241 = vmatprep.subr.bf16.mxu0 0
    %1242 = vmatpush1.bf16.msra.mxu0 0
    %1243 = vmatprep.subr.bf16.mxu0 0
    %1244 = vmatpush1.bf16.msra.mxu0 0
    %1245 = vmatprep.mubr.bf16.mxu0 0
    %1246 = vmatmul.mubr.bf16.gmra.mrb[0].mxu0 %v1205
    %v1247 = vpop.f32.mrb[0].mxu0
    %v1248 = vadd.f32 0.0, %v1247
    %v1249 = vpop.f32.mrb[0].mxu0
    %v1250 = vpop.f32.mrb[0].mxu0
    %v1251 = vadd.f32 0.0, %v1250
    %v1252 = vpop.f32.mrb[0].mxu0
    %1253 = vmatprep.mubr.bf16.mxu0 0
    %1254 = vmatmul.mubr.bf16.gmra.mrb[0].mxu0 %v1208
    %v1255 = vpop.f32.mrb[0].mxu0
    %v1256 = vadd.f32 0.0, %v1255
    %v1257 = vpop.f32.mrb[0].mxu0
    %v1258 = vpop.f32.mrb[0].mxu0
    %v1259 = vadd.f32 0.0, %v1258
    %v1260 = vpop.f32.mrb[0].mxu0
    %1261 = vdwg.mxu0
    %v1262 = vsub.f32 %v1172, %v1248
    %v1263 = vsub.f32 %v1175, %v1251
    %v1264 = vsub.f32 %v1180, %v1256
    %v1265 = vsub.f32 %v1183, %v1259
    %v1266 = vmul.f32 %v1262, 0.001
    %v1267 = vmul.f32 %v1263, 0.001
    %v1268 = vmul.f32 %v1264, 0.001
    %v1269 = vmul.f32 %v1265, 0.001
    %v1270 = vadd.f32 %v1045, %v1266
    %v1271 = vadd.f32 %v1046, %v1267
    %v1272 = vadd.f32 %v1047, %v1268
    %v1273 = vadd.f32 %v1048, %v1269
    %v1274 = vmax.f32 %v815, %v1270
    %v1275 = vmax.f32 %v816, %v1271
    %v1276 = vmax.f32 %v817, %v1272
    %v1277 = vmax.f32 %v818, %v1273
    %v1278 = vmin.f32 %v819, %v1274
    %v1279 = vmin.f32 %v820, %v1275
    %v1280 = vmin.f32 %v821, %v1276
    %v1281 = vmin.f32 %v822, %v1277
    %v1282 = vpack.c.bf16 %v1279, %v1278
    %v1283 = vpack.c.bf16 %v1281, %v1280
    %v1284 = vrot.slane %v824, 2
    %v1286 = vsel %vm827, %v1284, 0
    %1288 = vmatprep.subr.bf16.mxu0 0
    %1289 = vmatpush1.bf16.msra.mxu0 %v1282
    %1290 = vmatprep.subr.bf16.mxu0 0
    %1291 = vmatpush1.bf16.msra.mxu0 %v1283
    %1292 = vmatprep.subr.bf16.mxu0 0
    %1293 = vmatpush1.bf16.msra.mxu0 0
    %1294 = vmatprep.subr.bf16.mxu0 0
    %1295 = vmatpush1.bf16.msra.mxu0 0
    %1296 = vmatprep.subr.bf16.mxu0 0
    %1297 = vmatpush1.bf16.msra.mxu0 0
    %1298 = vmatprep.subr.bf16.mxu0 0
    %1299 = vmatpush1.bf16.msra.mxu0 0
    %1300 = vmatprep.subr.bf16.mxu0 0
    %1301 = vmatpush1.bf16.msra.mxu0 0
    %1302 = vmatprep.subr.bf16.mxu0 0
    %1303 = vmatpush1.bf16.msra.mxu0 0
    %1304 = vmatprep.subr.bf16.mxu0 0
    %1305 = vmatpush1.bf16.msra.mxu0 0
    %1306 = vmatprep.subr.bf16.mxu0 0
    %1307 = vmatpush1.bf16.msra.mxu0 0
    %1308 = vmatprep.subr.bf16.mxu0 0
    %1309 = vmatpush1.bf16.msra.mxu0 0
    %1310 = vmatprep.subr.bf16.mxu0 0
    %1311 = vmatpush1.bf16.msra.mxu0 0
    %1312 = vmatprep.subr.bf16.mxu0 0
    %1313 = vmatpush1.bf16.msra.mxu0 0
    %1314 = vmatprep.subr.bf16.mxu0 0
    %1315 = vmatpush1.bf16.msra.mxu0 0
    %1316 = vmatprep.subr.bf16.mxu0 0
    %1317 = vmatpush1.bf16.msra.mxu0 0
    %1318 = vmatprep.subr.bf16.mxu0 0
    %1319 = vmatpush1.bf16.msra.mxu0 0
    %1320 = vmatprep.mubr.bf16.mxu0 0
    %1321 = vmatmul.mubr.bf16.gmra.mrb[0].mxu0 %v1286
    %v1322 = vpop.f32.mrb[0].mxu0
    %v1323 = vadd.f32 0.0, %v1322
    %v1324 = vpop.f32.mrb[0].mxu0
    %v1325 = vpop.f32.mrb[0].mxu0
    %v1326 = vpop.f32.mrb[0].mxu0
    %1327 = vdwg.mxu0
    %v1328 = vmul.f32 %v1099, 0.9
    %v1329 = vsub.f32 1.0, %v1102
    %v1330 = vmul.f32 %v1328, %v1329
    %v1331 = vadd.f32 %v1330, %v1323
    %vm1332 = vcmp.ge.f32.partialorder %v1331, 0.5
    %v1333 = vsel %vm1332, 1, 0
    %v1334 = vcvt.s32.f32 %v1333
    %v1335 = vmul.f32 %v1107, 0.95122945
    %v1336 = vrot.slane %v801, 4
    %v1338 = vadd.f32 %v1335, %v1336
    %v1339 = vmul.f32 %v1109, 0.95122945
    %v1340 = vadd.f32 %v1339, %v1334
    %v1341 = vpack.c.bf16 %v1338, %v1338
    %v1342 = vpack.c.bf16 %v1334, %v1334
    %1343 = vxpose.xlu0.c.b16.start [1/8] %v1341, 128
    %1344 = vxpose.xlu0.c.b16.cont [2/8] 0, 128
    %1345 = vxpose.xlu0.c.b16.cont [3/8] 0, 128
    %1346 = vxpose.xlu0.c.b16.cont [4/8] 0, 128
    %1347 = vxpose.xlu0.c.b16.cont [5/8] 0, 128
    %1348 = vxpose.xlu0.c.b16.cont [6/8] 0, 128
    %1349 = vxpose.xlu0.c.b16.cont [7/8] 0, 128
    %1350 = vxpose.xlu0.c.b16.end [8/8] 0, 128
    %v1351 = vpop.trf.xlu0
    %v1352 = vpop.trf.xlu0
    %v1353 = vpop.trf.xlu0
    %v1354 = vpop.trf.xlu0
    %v1355 = vpop.trf.xlu0
    %v1356 = vpop.trf.xlu0
    %v1357 = vpop.trf.xlu0
    %v1358 = vpop.trf.xlu0
    %v1360 = vsel %vm894, %v1351, 0
    %v1363 = vsel %vm894, %v1352, 0
    %v1366 = vsel %vm901, %v1342, 0
    %1368 = vmatprep.subr.bf16.mxu0 0
    %1369 = vmatpush1.bf16.msra.mxu0 %v1366
    %1370 = vmatprep.subr.bf16.mxu0 0
    %1371 = vmatpush1.bf16.msra.mxu0 0
    %1372 = vmatprep.subr.bf16.mxu0 0
    %1373 = vmatpush1.bf16.msra.mxu0 0
    %1374 = vmatprep.subr.bf16.mxu0 0
    %1375 = vmatpush1.bf16.msra.mxu0 0
    %1376 = vmatprep.subr.bf16.mxu0 0
    %1377 = vmatpush1.bf16.msra.mxu0 0
    %1378 = vmatprep.subr.bf16.mxu0 0
    %1379 = vmatpush1.bf16.msra.mxu0 0
    %1380 = vmatprep.subr.bf16.mxu0 0
    %1381 = vmatpush1.bf16.msra.mxu0 0
    %1382 = vmatprep.subr.bf16.mxu0 0
    %1383 = vmatpush1.bf16.msra.mxu0 0
    %1384 = vmatprep.subr.bf16.mxu0 0
    %1385 = vmatpush1.bf16.msra.mxu0 0
    %1386 = vmatprep.subr.bf16.mxu0 0
    %1387 = vmatpush1.bf16.msra.mxu0 0
    %1388 = vmatprep.subr.bf16.mxu0 0
    %1389 = vmatpush1.bf16.msra.mxu0 0
    %1390 = vmatprep.subr.bf16.mxu0 0
    %1391 = vmatpush1.bf16.msra.mxu0 0
    %1392 = vmatprep.subr.bf16.mxu0 0
    %1393 = vmatpush1.bf16.msra.mxu0 0
    %1394 = vmatprep.subr.bf16.mxu0 0
    %1395 = vmatpush1.bf16.msra.mxu0 0
    %1396 = vmatprep.subr.bf16.mxu0 0
    %1397 = vmatpush1.bf16.msra.mxu0 0
    %1398 = vmatprep.subr.bf16.mxu0 0
    %1399 = vmatpush1.bf16.msra.mxu0 0
    %1400 = vmatprep.mubr.bf16.mxu0 0
    %1401 = vmatmul.mubr.bf16.gmra.mrb[0].mxu0 %v1360
    %v1402 = vpop.f32.mrb[0].mxu0
    %v1403 = vadd.f32 0.0, %v1402
    %v1404 = vpop.f32.mrb[0].mxu0
    %v1405 = vpop.f32.mrb[0].mxu0
    %v1406 = vadd.f32 0.0, %v1405
    %v1407 = vpop.f32.mrb[0].mxu0
    %1408 = vmatprep.mubr.bf16.mxu0 0
    %1409 = vmatmul.mubr.bf16.gmra.mrb[0].mxu0 %v1363
    %v1410 = vpop.f32.mrb[0].mxu0
    %v1411 = vadd.f32 0.0, %v1410
    %v1412 = vpop.f32.mrb[0].mxu0
    %v1413 = vpop.f32.mrb[0].mxu0
    %v1414 = vadd.f32 0.0, %v1413
    %v1415 = vpop.f32.mrb[0].mxu0
    %1416 = vdwg.mxu0
    %v1417 = vpack.c.bf16 %v1340, %v1340
    %1419 = vxpose.xlu0.c.b16.start [1/8] %v1284, 128
    %1420 = vxpose.xlu0.c.b16.cont [2/8] 0, 128
    %1421 = vxpose.xlu0.c.b16.cont [3/8] 0, 128
    %1422 = vxpose.xlu0.c.b16.cont [4/8] 0, 128
    %1423 = vxpose.xlu0.c.b16.cont [5/8] 0, 128
    %1424 = vxpose.xlu0.c.b16.cont [6/8] 0, 128
    %1425 = vxpose.xlu0.c.b16.cont [7/8] 0, 128
    %1426 = vxpose.xlu0.c.b16.end [8/8] 0, 128
    %v1427 = vpop.trf.xlu0
    %v1428 = vpop.trf.xlu0
    %v1429 = vpop.trf.xlu0
    %v1430 = vpop.trf.xlu0
    %v1431 = vpop.trf.xlu0
    %v1432 = vpop.trf.xlu0
    %v1433 = vpop.trf.xlu0
    %v1434 = vpop.trf.xlu0
    %v1436 = vsel %vm894, %v1427, 0
    %v1439 = vsel %vm894, %v1428, 0
    %v1442 = vsel %vm901, %v1417, 0
    %1444 = vmatprep.subr.bf16.mxu0 0
    %1445 = vmatpush1.bf16.msra.mxu0 %v1442
    %1446 = vmatprep.subr.bf16.mxu0 0
    %1447 = vmatpush1.bf16.msra.mxu0 0
    %1448 = vmatprep.subr.bf16.mxu0 0
    %1449 = vmatpush1.bf16.msra.mxu0 0
    %1450 = vmatprep.subr.bf16.mxu0 0
    %1451 = vmatpush1.bf16.msra.mxu0 0
    %1452 = vmatprep.subr.bf16.mxu0 0
    %1453 = vmatpush1.bf16.msra.mxu0 0
    %1454 = vmatprep.subr.bf16.mxu0 0
    %1455 = vmatpush1.bf16.msra.mxu0 0
    %1456 = vmatprep.subr.bf16.mxu0 0
    %1457 = vmatpush1.bf16.msra.mxu0 0
    %1458 = vmatprep.subr.bf16.mxu0 0
    %1459 = vmatpush1.bf16.msra.mxu0 0
    %1460 = vmatprep.subr.bf16.mxu0 0
    %1461 = vmatpush1.bf16.msra.mxu0 0
    %1462 = vmatprep.subr.bf16.mxu0 0
    %1463 = vmatpush1.bf16.msra.mxu0 0
    %1464 = vmatprep.subr.bf16.mxu0 0
    %1465 = vmatpush1.bf16.msra.mxu0 0
    %1466 = vmatprep.subr.bf16.mxu0 0
    %1467 = vmatpush1.bf16.msra.mxu0 0
    %1468 = vmatprep.subr.bf16.mxu0 0
    %1469 = vmatpush1.bf16.msra.mxu0 0
    %1470 = vmatprep.subr.bf16.mxu0 0
    %1471 = vmatpush1.bf16.msra.mxu0 0
    %1472 = vmatprep.subr.bf16.mxu0 0
    %1473 = vmatpush1.bf16.msra.mxu0 0
    %1474 = vmatprep.subr.bf16.mxu0 0
    %1475 = vmatpush1.bf16.msra.mxu0 0
    %1476 = vmatprep.mubr.bf16.mxu0 0
    %1477 = vmatmul.mubr.bf16.gmra.mrb[0].mxu0 %v1436
    %v1478 = vpop.f32.mrb[0].mxu0
    %v1479 = vadd.f32 0.0, %v1478
    %v1480 = vpop.f32.mrb[0].mxu0
    %v1481 = vpop.f32.mrb[0].mxu0
    %v1482 = vadd.f32 0.0, %v1481
    %v1483 = vpop.f32.mrb[0].mxu0
    %1484 = vmatprep.mubr.bf16.mxu0 0
    %1485 = vmatmul.mubr.bf16.gmra.mrb[0].mxu0 %v1439
    %v1486 = vpop.f32.mrb[0].mxu0
    %v1487 = vadd.f32 0.0, %v1486
    %v1488 = vpop.f32.mrb[0].mxu0
    %v1489 = vpop.f32.mrb[0].mxu0
    %v1490 = vadd.f32 0.0, %v1489
    %v1491 = vpop.f32.mrb[0].mxu0
    %1492 = vdwg.mxu0
    %v1493 = vsub.f32 %v1403, %v1479
    %v1494 = vsub.f32 %v1406, %v1482
    %v1495 = vsub.f32 %v1411, %v1487
    %v1496 = vsub.f32 %v1414, %v1490
    %v1497 = vmul.f32 %v1493, 0.001
    %v1498 = vmul.f32 %v1494, 0.001
    %v1499 = vmul.f32 %v1495, 0.001
    %v1500 = vmul.f32 %v1496, 0.001
    %v1501 = vadd.f32 %v1278, %v1497
    %v1502 = vadd.f32 %v1279, %v1498
    %v1503 = vadd.f32 %v1280, %v1499
    %v1504 = vadd.f32 %v1281, %v1500
    %v1505 = vmax.f32 %v815, %v1501
    %v1506 = vmax.f32 %v816, %v1502
    %v1507 = vmax.f32 %v817, %v1503
    %v1508 = vmax.f32 %v818, %v1504
    %v1509 = vmin.f32 %v819, %v1505
    %v1510 = vmin.f32 %v820, %v1506
    %v1511 = vmin.f32 %v821, %v1507
    %v1512 = vmin.f32 %v822, %v1508
    %1514 = vrot.lane.b32.xlu0 %v1331, 32
    %v1515 = vpop.permute.xlu0 %1514
    %vm1517 = vcmask 386304
    %1518 = vst.msk [vmem:[#allocation2] sm:$0x3] %vm1517, %v1515
    %v1519 = vpack.c.bf16 %v1510, %v1509
    %v1520 = vpack.c.bf16 %v1512, %v1511
    %v1521 = vrot.slane %v824, 3
    %v1523 = vsel %vm827, %v1521, 0
    %1525 = vmatprep.subr.bf16.mxu0 0
    %1526 = vmatpush1.bf16.msra.mxu0 %v1519
    %1527 = vmatprep.subr.bf16.mxu0 0
    %1528 = vmatpush1.bf16.msra.mxu0 %v1520
    %1529 = vmatprep.subr.bf16.mxu0 0
    %1530 = vmatpush1.bf16.msra.mxu0 0
    %1531 = vmatprep.subr.bf16.mxu0 0
    %1532 = vmatpush1.bf16.msra.mxu0 0
    %1533 = vmatprep.subr.bf16.mxu0 0
    %1534 = vmatpush1.bf16.msra.mxu0 0
    %1535 = vmatprep.subr.bf16.mxu0 0
    %1536 = vmatpush1.bf16.msra.mxu0 0
    %1537 = vmatprep.subr.bf16.mxu0 0
    %1538 = vmatpush1.bf16.msra.mxu0 0
    %1539 = vmatprep.subr.bf16.mxu0 0
    %1540 = vmatpush1.bf16.msra.mxu0 0
    %1541 = vmatprep.subr.bf16.mxu0 0
    %1542 = vmatpush1.bf16.msra.mxu0 0
    %1543 = vmatprep.subr.bf16.mxu0 0
    %1544 = vmatpush1.bf16.msra.mxu0 0
    %1545 = vmatprep.subr.bf16.mxu0 0
    %1546 = vmatpush1.bf16.msra.mxu0 0
    %1547 = vmatprep.subr.bf16.mxu0 0
    %1548 = vmatpush1.bf16.msra.mxu0 0
    %1549 = vmatprep.subr.bf16.mxu0 0
    %1550 = vmatpush1.bf16.msra.mxu0 0
    %1551 = vmatprep.subr.bf16.mxu0 0
    %1552 = vmatpush1.bf16.msra.mxu0 0
    %1553 = vmatprep.subr.bf16.mxu0 0
    %1554 = vmatpush1.bf16.msra.mxu0 0
    %1555 = vmatprep.subr.bf16.mxu0 0
    %1556 = vmatpush1.bf16.msra.mxu0 0
    %1557 = vmatprep.mubr.bf16.mxu0 0
    %1558 = vmatmul.mubr.bf16.gmra.mrb[0].mxu0 %v1523
    %v1559 = vpop.f32.mrb[0].mxu0
    %v1560 = vadd.f32 0.0, %v1559
    %v1561 = vpop.f32.mrb[0].mxu0
    %v1562 = vpop.f32.mrb[0].mxu0
    %v1563 = vpop.f32.mrb[0].mxu0
    %1564 = vdwg.mxu0
    %v1565 = vmul.f32 %v1331, 0.9
    %v1566 = vsub.f32 1.0, %v1334
    %v1567 = vmul.f32 %v1565, %v1566
    %v1568 = vadd.f32 %v1567, %v1560
    %vm1569 = vcmp.ge.f32.partialorder %v1568, 0.5
    %v1570 = vsel %vm1569, 1, 0
    %v1571 = vcvt.s32.f32 %v1570
    %v1572 = vmul.f32 %v1338, 0.95122945
    %v1573 = vrot.slane %v801, 6
    %v1575 = vadd.f32 %v1572, %v1573
    %v1576 = vmul.f32 %v1340, 0.95122945
    %v1577 = vadd.f32 %v1576, %v1571
    %v1578 = vpack.c.bf16 %v1575, %v1575
    %v1579 = vpack.c.bf16 %v1571, %v1571
    %1580 = vxpose.xlu0.c.b16.start [1/8] %v1578, 128
    %1581 = vxpose.xlu0.c.b16.cont [2/8] 0, 128
    %1582 = vxpose.xlu0.c.b16.cont [3/8] 0, 128
    %1583 = vxpose.xlu0.c.b16.cont [4/8] 0, 128
    %1584 = vxpose.xlu0.c.b16.cont [5/8] 0, 128
    %1585 = vxpose.xlu0.c.b16.cont [6/8] 0, 128
    %1586 = vxpose.xlu0.c.b16.cont [7/8] 0, 128
    %1587 = vxpose.xlu0.c.b16.end [8/8] 0, 128
    %v1588 = vpop.trf.xlu0
    %v1589 = vpop.trf.xlu0
    %v1590 = vpop.trf.xlu0
    %v1591 = vpop.trf.xlu0
    %v1592 = vpop.trf.xlu0
    %v1593 = vpop.trf.xlu0
    %v1594 = vpop.trf.xlu0
    %v1595 = vpop.trf.xlu0
    %v1597 = vsel %vm894, %v1588, 0
    %v1600 = vsel %vm894, %v1589, 0
    %v1603 = vsel %vm901, %v1579, 0
    %1605 = vmatprep.subr.bf16.mxu0 0
    %1606 = vmatpush1.bf16.msra.mxu0 %v1603
    %1607 = vmatprep.subr.bf16.mxu0 0
    %1608 = vmatpush1.bf16.msra.mxu0 0
    %1609 = vmatprep.subr.bf16.mxu0 0
    %1610 = vmatpush1.bf16.msra.mxu0 0
    %1611 = vmatprep.subr.bf16.mxu0 0
    %1612 = vmatpush1.bf16.msra.mxu0 0
    %1613 = vmatprep.subr.bf16.mxu0 0
    %1614 = vmatpush1.bf16.msra.mxu0 0
    %1615 = vmatprep.subr.bf16.mxu0 0
    %1616 = vmatpush1.bf16.msra.mxu0 0
    %1617 = vmatprep.subr.bf16.mxu0 0
    %1618 = vmatpush1.bf16.msra.mxu0 0
    %1619 = vmatprep.subr.bf16.mxu0 0
    %1620 = vmatpush1.bf16.msra.mxu0 0
    %1621 = vmatprep.subr.bf16.mxu0 0
    %1622 = vmatpush1.bf16.msra.mxu0 0
    %1623 = vmatprep.subr.bf16.mxu0 0
    %1624 = vmatpush1.bf16.msra.mxu0 0
    %1625 = vmatprep.subr.bf16.mxu0 0
    %1626 = vmatpush1.bf16.msra.mxu0 0
    %1627 = vmatprep.subr.bf16.mxu0 0
    %1628 = vmatpush1.bf16.msra.mxu0 0
    %1629 = vmatprep.subr.bf16.mxu0 0
    %1630 = vmatpush1.bf16.msra.mxu0 0
    %1631 = vmatprep.subr.bf16.mxu0 0
    %1632 = vmatpush1.bf16.msra.mxu0 0
    %1633 = vmatprep.subr.bf16.mxu0 0
    %1634 = vmatpush1.bf16.msra.mxu0 0
    %1635 = vmatprep.subr.bf16.mxu0 0
    %1636 = vmatpush1.bf16.msra.mxu0 0
    %1637 = vmatprep.mubr.bf16.mxu0 0
    %1638 = vmatmul.mubr.bf16.gmra.mrb[0].mxu0 %v1597
    %v1639 = vpop.f32.mrb[0].mxu0
    %v1640 = vadd.f32 0.0, %v1639
    %v1641 = vpop.f32.mrb[0].mxu0
    %v1642 = vpop.f32.mrb[0].mxu0
    %v1643 = vadd.f32 0.0, %v1642
    %v1644 = vpop.f32.mrb[0].mxu0
    %1645 = vmatprep.mubr.bf16.mxu0 0
    %1646 = vmatmul.mubr.bf16.gmra.mrb[0].mxu0 %v1600
    %v1647 = vpop.f32.mrb[0].mxu0
    %v1648 = vadd.f32 0.0, %v1647
    %v1649 = vpop.f32.mrb[0].mxu0
    %v1650 = vpop.f32.mrb[0].mxu0
    %v1651 = vadd.f32 0.0, %v1650
    %v1652 = vpop.f32.mrb[0].mxu0
    %1653 = vdwg.mxu0
    %v1654 = vpack.c.bf16 %v1577, %v1577
    %1656 = vxpose.xlu0.c.b16.start [1/8] %v1521, 128
    %1657 = vxpose.xlu0.c.b16.cont [2/8] 0, 128
    %1658 = vxpose.xlu0.c.b16.cont [3/8] 0, 128
    %1659 = vxpose.xlu0.c.b16.cont [4/8] 0, 128
    %1660 = vxpose.xlu0.c.b16.cont [5/8] 0, 128
    %1661 = vxpose.xlu0.c.b16.cont [6/8] 0, 128
    %1662 = vxpose.xlu0.c.b16.cont [7/8] 0, 128
    %1663 = vxpose.xlu0.c.b16.end [8/8] 0, 128
    %v1664 = vpop.trf.xlu0
    %v1665 = vpop.trf.xlu0
    %v1666 = vpop.trf.xlu0
    %v1667 = vpop.trf.xlu0
    %v1668 = vpop.trf.xlu0
    %v1669 = vpop.trf.xlu0
    %v1670 = vpop.trf.xlu0
    %v1671 = vpop.trf.xlu0
    %v1673 = vsel %vm894, %v1664, 0
    %v1676 = vsel %vm894, %v1665, 0
    %v1679 = vsel %vm901, %v1654, 0
    %1681 = vmatprep.subr.bf16.mxu0 0
    %1682 = vmatpush1.bf16.msra.mxu0 %v1679
    %1683 = vmatprep.subr.bf16.mxu0 0
    %1684 = vmatpush1.bf16.msra.mxu0 0
    %1685 = vmatprep.subr.bf16.mxu0 0
    %1686 = vmatpush1.bf16.msra.mxu0 0
    %1687 = vmatprep.subr.bf16.mxu0 0
    %1688 = vmatpush1.bf16.msra.mxu0 0
    %1689 = vmatprep.subr.bf16.mxu0 0
    %1690 = vmatpush1.bf16.msra.mxu0 0
    %1691 = vmatprep.subr.bf16.mxu0 0
    %1692 = vmatpush1.bf16.msra.mxu0 0
    %1693 = vmatprep.subr.bf16.mxu0 0
    %1694 = vmatpush1.bf16.msra.mxu0 0
    %1695 = vmatprep.subr.bf16.mxu0 0
    %1696 = vmatpush1.bf16.msra.mxu0 0
    %1697 = vmatprep.subr.bf16.mxu0 0
    %1698 = vmatpush1.bf16.msra.mxu0 0
    %1699 = vmatprep.subr.bf16.mxu0 0
    %1700 = vmatpush1.bf16.msra.mxu0 0
    %1701 = vmatprep.subr.bf16.mxu0 0
    %1702 = vmatpush1.bf16.msra.mxu0 0
    %1703 = vmatprep.subr.bf16.mxu0 0
    %1704 = vmatpush1.bf16.msra.mxu0 0
    %1705 = vmatprep.subr.bf16.mxu0 0
    %1706 = vmatpush1.bf16.msra.mxu0 0
    %1707 = vmatprep.subr.bf16.mxu0 0
    %1708 = vmatpush1.bf16.msra.mxu0 0
    %1709 = vmatprep.subr.bf16.mxu0 0
    %1710 = vmatpush1.bf16.msra.mxu0 0
    %1711 = vmatprep.subr.bf16.mxu0 0
    %1712 = vmatpush1.bf16.msra.mxu0 0
    %1713 = vmatprep.mubr.bf16.mxu0 0
    %1714 = vmatmul.mubr.bf16.gmra.mrb[0].mxu0 %v1673
    %v1715 = vpop.f32.mrb[0].mxu0
    %v1716 = vadd.f32 0.0, %v1715
    %v1717 = vpop.f32.mrb[0].mxu0
    %v1718 = vpop.f32.mrb[0].mxu0
    %v1719 = vadd.f32 0.0, %v1718
    %v1720 = vpop.f32.mrb[0].mxu0
    %1721 = vmatprep.mubr.bf16.mxu0 0
    %1722 = vmatmul.mubr.bf16.gmra.mrb[0].mxu0 %v1676
    %v1723 = vpop.f32.mrb[0].mxu0
    %v1724 = vadd.f32 0.0, %v1723
    %v1725 = vpop.f32.mrb[0].mxu0
    %v1726 = vpop.f32.mrb[0].mxu0
    %v1727 = vadd.f32 0.0, %v1726
    %v1728 = vpop.f32.mrb[0].mxu0
    %1729 = vdwg.mxu0
    %v1730 = vsub.f32 %v1640, %v1716
    %v1731 = vsub.f32 %v1643, %v1719
    %v1732 = vsub.f32 %v1648, %v1724
    %v1733 = vsub.f32 %v1651, %v1727
    %v1734 = vmul.f32 %v1730, 0.001
    %v1735 = vmul.f32 %v1731, 0.001
    %v1736 = vmul.f32 %v1732, 0.001
    %v1737 = vmul.f32 %v1733, 0.001
    %v1738 = vadd.f32 %v1509, %v1734
    %v1739 = vadd.f32 %v1510, %v1735
    %v1740 = vadd.f32 %v1511, %v1736
    %v1741 = vadd.f32 %v1512, %v1737
    %v1742 = vmax.f32 %v815, %v1738
    %v1743 = vmax.f32 %v816, %v1739
    %v1744 = vmax.f32 %v817, %v1740
    %v1745 = vmax.f32 %v818, %v1741
    %v1746 = vmin.f32 %v819, %v1742
    %v1747 = vmin.f32 %v820, %v1743
    %v1748 = vmin.f32 %v821, %v1744
    %v1749 = vmin.f32 %v822, %v1745
    %1751 = vrot.lane.b32.xlu0 %v1568, 48
    %v1752 = vpop.permute.xlu0 %1751
    %vm1754 = vcmask 517504
    %1755 = vst.msk [vmem:[#allocation2] sm:$0x3] %vm1754, %v1752
    %v1756 = vpack.c.bf16 %v802, %v802
    %v1757 = vpack.c.bf16 %v1747, %v1746
    %v1758 = vpack.c.bf16 %v1749, %v1748
    %v1760 = vsel %vm827, %v1756, 0
    %1762 = vmatprep.subr.bf16.mxu0 0
    %1763 = vmatpush1.bf16.msra.mxu0 %v1757
    %1764 = vmatprep.subr.bf16.mxu0 0
    %1765 = vmatpush1.bf16.msra.mxu0 %v1758
    %1766 = vmatprep.subr.bf16.mxu0 0
    %1767 = vmatpush1.bf16.msra.mxu0 0
    %1768 = vmatprep.subr.bf16.mxu0 0
    %1769 = vmatpush1.bf16.msra.mxu0 0
    %1770 = vmatprep.subr.bf16.mxu0 0
    %1771 = vmatpush1.bf16.msra.mxu0 0
    %1772 = vmatprep.subr.bf16.mxu0 0
    %1773 = vmatpush1.bf16.msra.mxu0 0
    %1774 = vmatprep.subr.bf16.mxu0 0
    %1775 = vmatpush1.bf16.msra.mxu0 0
    %1776 = vmatprep.subr.bf16.mxu0 0
    %1777 = vmatpush1.bf16.msra.mxu0 0
    %1778 = vmatprep.subr.bf16.mxu0 0
    %1779 = vmatpush1.bf16.msra.mxu0 0
    %1780 = vmatprep.subr.bf16.mxu0 0
    %1781 = vmatpush1.bf16.msra.mxu0 0
    %1782 = vmatprep.subr.bf16.mxu0 0
    %1783 = vmatpush1.bf16.msra.mxu0 0
    %1784 = vmatprep.subr.bf16.mxu0 0
    %1785 = vmatpush1.bf16.msra.mxu0 0
    %1786 = vmatprep.subr.bf16.mxu0 0
    %1787 = vmatpush1.bf16.msra.mxu0 0
    %1788 = vmatprep.subr.bf16.mxu0 0
    %1789 = vmatpush1.bf16.msra.mxu0 0
    %1790 = vmatprep.subr.bf16.mxu0 0
    %1791 = vmatpush1.bf16.msra.mxu0 0
    %1792 = vmatprep.subr.bf16.mxu0 0
    %1793 = vmatpush1.bf16.msra.mxu0 0
    %1794 = vmatprep.mubr.bf16.mxu0 0
    %1795 = vmatmul.mubr.bf16.gmra.mrb[0].mxu0 %v1760
    %v1796 = vpop.f32.mrb[0].mxu0
    %v1797 = vadd.f32 0.0, %v1796
    %v1798 = vpop.f32.mrb[0].mxu0
    %v1799 = vpop.f32.mrb[0].mxu0
    %v1800 = vpop.f32.mrb[0].mxu0
    %1801 = vdwg.mxu0
    %v1802 = vmul.f32 %v1568, 0.9
    %v1803 = vsub.f32 1.0, %v1571
    %v1804 = vmul.f32 %v1802, %v1803
    %v1805 = vadd.f32 %v1804, %v1797
    %vm1806 = vcmp.ge.f32.partialorder %v1805, 0.5
    %v1807 = vsel %vm1806, 1, 0
    %v1808 = vcvt.s32.f32 %v1807
    %v1809 = vmul.f32 %v1575, 0.95122945
    %v1810 = vadd.f32 %v1809, %v802
    %v1811 = vmul.f32 %v1577, 0.95122945
    %v1812 = vadd.f32 %v1811, %v1808
    %v1813 = vpack.c.bf16 %v1810, %v1810
    %v1814 = vpack.c.bf16 %v1808, %v1808
    %1815 = vxpose.xlu0.c.b16.start [1/8] %v1813, 128
    %1816 = vxpose.xlu0.c.b16.cont [2/8] 0, 128
    %1817 = vxpose.xlu0.c.b16.cont [3/8] 0, 128
    %1818 = vxpose.xlu0.c.b16.cont [4/8] 0, 128
    %1819 = vxpose.xlu0.c.b16.cont [5/8] 0, 128
    %1820 = vxpose.xlu0.c.b16.cont [6/8] 0, 128
    %1821 = vxpose.xlu0.c.b16.cont [7/8] 0, 128
    %1822 = vxpose.xlu0.c.b16.end [8/8] 0, 128
    %v1823 = vpop.trf.xlu0
    %v1824 = vpop.trf.xlu0
    %v1825 = vpop.trf.xlu0
    %v1826 = vpop.trf.xlu0
    %v1827 = vpop.trf.xlu0
    %v1828 = vpop.trf.xlu0
    %v1829 = vpop.trf.xlu0
    %v1830 = vpop.trf.xlu0
    %v1832 = vsel %vm894, %v1823, 0
    %v1835 = vsel %vm894, %v1824, 0
    %v1838 = vsel %vm901, %v1814, 0
    %1840 = vmatprep.subr.bf16.mxu0 0
    %1841 = vmatpush1.bf16.msra.mxu0 %v1838
    %1842 = vmatprep.subr.bf16.mxu0 0
    %1843 = vmatpush1.bf16.msra.mxu0 0
    %1844 = vmatprep.subr.bf16.mxu0 0
    %1845 = vmatpush1.bf16.msra.mxu0 0
    %1846 = vmatprep.subr.bf16.mxu0 0
    %1847 = vmatpush1.bf16.msra.mxu0 0
    %1848 = vmatprep.subr.bf16.mxu0 0
    %1849 = vmatpush1.bf16.msra.mxu0 0
    %1850 = vmatprep.subr.bf16.mxu0 0
    %1851 = vmatpush1.bf16.msra.mxu0 0
    %1852 = vmatprep.subr.bf16.mxu0 0
    %1853 = vmatpush1.bf16.msra.mxu0 0
    %1854 = vmatprep.subr.bf16.mxu0 0
    %1855 = vmatpush1.bf16.msra.mxu0 0
    %1856 = vmatprep.subr.bf16.mxu0 0
    %1857 = vmatpush1.bf16.msra.mxu0 0
    %1858 = vmatprep.subr.bf16.mxu0 0
    %1859 = vmatpush1.bf16.msra.mxu0 0
    %1860 = vmatprep.subr.bf16.mxu0 0
    %1861 = vmatpush1.bf16.msra.mxu0 0
    %1862 = vmatprep.subr.bf16.mxu0 0
    %1863 = vmatpush1.bf16.msra.mxu0 0
    %1864 = vmatprep.subr.bf16.mxu0 0
    %1865 = vmatpush1.bf16.msra.mxu0 0
    %1866 = vmatprep.subr.bf16.mxu0 0
    %1867 = vmatpush1.bf16.msra.mxu0 0
    %1868 = vmatprep.subr.bf16.mxu0 0
    %1869 = vmatpush1.bf16.msra.mxu0 0
    %1870 = vmatprep.subr.bf16.mxu0 0
    %1871 = vmatpush1.bf16.msra.mxu0 0
    %1872 = vmatprep.mubr.bf16.mxu0 0
    %1873 = vmatmul.mubr.bf16.gmra.mrb[0].mxu0 %v1832
    %v1874 = vpop.f32.mrb[0].mxu0
    %v1875 = vadd.f32 0.0, %v1874
    %v1876 = vpop.f32.mrb[0].mxu0
    %v1877 = vpop.f32.mrb[0].mxu0
    %v1878 = vadd.f32 0.0, %v1877
    %v1879 = vpop.f32.mrb[0].mxu0
    %1880 = vmatprep.mubr.bf16.mxu0 0
    %1881 = vmatmul.mubr.bf16.gmra.mrb[0].mxu0 %v1835
    %v1882 = vpop.f32.mrb[0].mxu0
    %v1883 = vadd.f32 0.0, %v1882
    %v1884 = vpop.f32.mrb[0].mxu0
    %v1885 = vpop.f32.mrb[0].mxu0
    %v1886 = vadd.f32 0.0, %v1885
    %v1887 = vpop.f32.mrb[0].mxu0
    %1888 = vdwg.mxu0
    %v1889 = vpack.c.bf16 %v1812, %v1812
    %1890 = vxpose.xlu0.c.b16.start [1/8] %v1756, 128
    %1891 = vxpose.xlu0.c.b16.cont [2/8] 0, 128
    %1892 = vxpose.xlu0.c.b16.cont [3/8] 0, 128
    %1893 = vxpose.xlu0.c.b16.cont [4/8] 0, 128
    %1894 = vxpose.xlu0.c.b16.cont [5/8] 0, 128
    %1895 = vxpose.xlu0.c.b16.cont [6/8] 0, 128
    %1896 = vxpose.xlu0.c.b16.cont [7/8] 0, 128
    %1897 = vxpose.xlu0.c.b16.end [8/8] 0, 128
    %v1898 = vpop.trf.xlu0
    %v1899 = vpop.trf.xlu0
    %v1900 = vpop.trf.xlu0
    %v1901 = vpop.trf.xlu0
    %v1902 = vpop.trf.xlu0
    %v1903 = vpop.trf.xlu0
    %v1904 = vpop.trf.xlu0
    %v1905 = vpop.trf.xlu0
    %v1907 = vsel %vm894, %v1898, 0
    %v1910 = vsel %vm894, %v1899, 0
    %v1913 = vsel %vm901, %v1889, 0
    %1915 = vmatprep.subr.bf16.mxu0 0
    %1916 = vmatpush1.bf16.msra.mxu0 %v1913
    %1917 = vmatprep.subr.bf16.mxu0 0
    %1918 = vmatpush1.bf16.msra.mxu0 0
    %1919 = vmatprep.subr.bf16.mxu0 0
    %1920 = vmatpush1.bf16.msra.mxu0 0
    %1921 = vmatprep.subr.bf16.mxu0 0
    %1922 = vmatpush1.bf16.msra.mxu0 0
    %1923 = vmatprep.subr.bf16.mxu0 0
    %1924 = vmatpush1.bf16.msra.mxu0 0
    %1925 = vmatprep.subr.bf16.mxu0 0
    %1926 = vmatpush1.bf16.msra.mxu0 0
    %1927 = vmatprep.subr.bf16.mxu0 0
    %1928 = vmatpush1.bf16.msra.mxu0 0
    %1929 = vmatprep.subr.bf16.mxu0 0
    %1930 = vmatpush1.bf16.msra.mxu0 0
    %1931 = vmatprep.subr.bf16.mxu0 0
    %1932 = vmatpush1.bf16.msra.mxu0 0
    %1933 = vmatprep.subr.bf16.mxu0 0
    %1934 = vmatpush1.bf16.msra.mxu0 0
    %1935 = vmatprep.subr.bf16.mxu0 0
    %1936 = vmatpush1.bf16.msra.mxu0 0
    %1937 = vmatprep.subr.bf16.mxu0 0
    %1938 = vmatpush1.bf16.msra.mxu0 0
    %1939 = vmatprep.subr.bf16.mxu0 0
    %1940 = vmatpush1.bf16.msra.mxu0 0
    %1941 = vmatprep.subr.bf16.mxu0 0
    %1942 = vmatpush1.bf16.msra.mxu0 0
    %1943 = vmatprep.subr.bf16.mxu0 0
    %1944 = vmatpush1.bf16.msra.mxu0 0
    %1945 = vmatprep.subr.bf16.mxu0 0
    %1946 = vmatpush1.bf16.msra.mxu0 0
    %1947 = vmatprep.mubr.bf16.mxu0 0
    %1948 = vmatmul.mubr.bf16.gmra.mrb[0].mxu0 %v1907
    %v1949 = vpop.f32.mrb[0].mxu0
    %v1950 = vadd.f32 0.0, %v1949
    %v1951 = vpop.f32.mrb[0].mxu0
    %v1952 = vpop.f32.mrb[0].mxu0
    %v1953 = vadd.f32 0.0, %v1952
    %v1954 = vpop.f32.mrb[0].mxu0
    %1955 = vmatprep.mubr.bf16.mxu0 0
    %1956 = vmatmul.mubr.bf16.gmra.mrb[0].mxu0 %v1910
    %v1957 = vpop.f32.mrb[0].mxu0
    %v1958 = vadd.f32 0.0, %v1957
    %v1959 = vpop.f32.mrb[0].mxu0
    %v1960 = vpop.f32.mrb[0].mxu0
    %v1961 = vadd.f32 0.0, %v1960
    %v1962 = vpop.f32.mrb[0].mxu0
    %1963 = vdwg.mxu0
    %v1964 = vsub.f32 %v1875, %v1950
    %v1965 = vsub.f32 %v1878, %v1953
    %v1966 = vsub.f32 %v1883, %v1958
    %v1967 = vsub.f32 %v1886, %v1961
    %v1968 = vmul.f32 %v1964, 0.001
    %v1969 = vmul.f32 %v1965, 0.001
    %v1970 = vmul.f32 %v1966, 0.001
    %v1971 = vmul.f32 %v1967, 0.001
    %v1972 = vadd.f32 %v1746, %v1968
    %v1973 = vadd.f32 %v1747, %v1969
    %v1974 = vadd.f32 %v1748, %v1970
    %v1975 = vadd.f32 %v1749, %v1971
    %v1976 = vmax.f32 %v815, %v1972
    %v1977 = vmax.f32 %v816, %v1973
    %v1978 = vmax.f32 %v817, %v1974
    %v1979 = vmax.f32 %v818, %v1975
    %v1980 = vmin.f32 %v819, %v1976
    %v1981 = vmin.f32 %v820, %v1977
    %v1982 = vmin.f32 %v821, %v1978
    %v1983 = vmin.f32 %v822, %v1979
    %1985 = vrot.lane.b32.xlu0 %v1805, 64
    %v1986 = vpop.permute.xlu0 %1985
    %vm1988 = vcmask 648704
    %1989 = vst.msk [vmem:[#allocation2] sm:$0x3] %vm1988, %v1986
    %v1990 = vpack.c.bf16 %v1981, %v1980
    %v1991 = vpack.c.bf16 %v1983, %v1982
    %v1993 = vrot.slane %v1756, 1
    %v1995 = vsel %vm827, %v1993, 0
    %1997 = vmatprep.subr.bf16.mxu0 0
    %1998 = vmatpush1.bf16.msra.mxu0 %v1990
    %1999 = vmatprep.subr.bf16.mxu0 0
    %2000 = vmatpush1.bf16.msra.mxu0 %v1991
    %2001 = vmatprep.subr.bf16.mxu0 0
    %2002 = vmatpush1.bf16.msra.mxu0 0
    %2003 = vmatprep.subr.bf16.mxu0 0
    %2004 = vmatpush1.bf16.msra.mxu0 0
    %2005 = vmatprep.subr.bf16.mxu0 0
    %2006 = vmatpush1.bf16.msra.mxu0 0
    %2007 = vmatprep.subr.bf16.mxu0 0
    %2008 = vmatpush1.bf16.msra.mxu0 0
    %2009 = vmatprep.subr.bf16.mxu0 0
    %2010 = vmatpush1.bf16.msra.mxu0 0
    %2011 = vmatprep.subr.bf16.mxu0 0
    %2012 = vmatpush1.bf16.msra.mxu0 0
    %2013 = vmatprep.subr.bf16.mxu0 0
    %2014 = vmatpush1.bf16.msra.mxu0 0
    %2015 = vmatprep.subr.bf16.mxu0 0
    %2016 = vmatpush1.bf16.msra.mxu0 0
    %2017 = vmatprep.subr.bf16.mxu0 0
    %2018 = vmatpush1.bf16.msra.mxu0 0
    %2019 = vmatprep.subr.bf16.mxu0 0
    %2020 = vmatpush1.bf16.msra.mxu0 0
    %2021 = vmatprep.subr.bf16.mxu0 0
    %2022 = vmatpush1.bf16.msra.mxu0 0
    %2023 = vmatprep.subr.bf16.mxu0 0
    %2024 = vmatpush1.bf16.msra.mxu0 0
    %2025 = vmatprep.subr.bf16.mxu0 0
    %2026 = vmatpush1.bf16.msra.mxu0 0
    %2027 = vmatprep.subr.bf16.mxu0 0
    %2028 = vmatpush1.bf16.msra.mxu0 0
    %2029 = vmatprep.mubr.bf16.mxu0 0
    %2030 = vmatmul.mubr.bf16.gmra.mrb[0].mxu0 %v1995
    %v2031 = vpop.f32.mrb[0].mxu0
    %v2032 = vadd.f32 0.0, %v2031
    %v2033 = vpop.f32.mrb[0].mxu0
    %v2034 = vpop.f32.mrb[0].mxu0
    %v2035 = vpop.f32.mrb[0].mxu0
    %2036 = vdwg.mxu0
    %v2037 = vmul.f32 %v1805, 0.9
    %v2038 = vsub.f32 1.0, %v1808
    %v2039 = vmul.f32 %v2037, %v2038
    %v2040 = vadd.f32 %v2039, %v2032
    %vm2041 = vcmp.ge.f32.partialorder %v2040, 0.5
    %v2042 = vsel %vm2041, 1, 0
    %v2043 = vcvt.s32.f32 %v2042
    %v2044 = vmul.f32 %v1810, 0.95122945
    %v2046 = vrot.slane %v802, 2
    %v2048 = vadd.f32 %v2044, %v2046
    %v2049 = vmul.f32 %v1812, 0.95122945
    %v2050 = vadd.f32 %v2049, %v2043
    %v2051 = vpack.c.bf16 %v2048, %v2048
    %v2052 = vpack.c.bf16 %v2043, %v2043
    %2053 = vxpose.xlu0.c.b16.start [1/8] %v2051, 128
    %2054 = vxpose.xlu0.c.b16.cont [2/8] 0, 128
    %2055 = vxpose.xlu0.c.b16.cont [3/8] 0, 128
    %2056 = vxpose.xlu0.c.b16.cont [4/8] 0, 128
    %2057 = vxpose.xlu0.c.b16.cont [5/8] 0, 128
    %2058 = vxpose.xlu0.c.b16.cont [6/8] 0, 128
    %2059 = vxpose.xlu0.c.b16.cont [7/8] 0, 128
    %2060 = vxpose.xlu0.c.b16.end [8/8] 0, 128
    %v2061 = vpop.trf.xlu0
    %v2062 = vpop.trf.xlu0
    %v2063 = vpop.trf.xlu0
    %v2064 = vpop.trf.xlu0
    %v2065 = vpop.trf.xlu0
    %v2066 = vpop.trf.xlu0
    %v2067 = vpop.trf.xlu0
    %v2068 = vpop.trf.xlu0
    %v2070 = vsel %vm894, %v2061, 0
    %v2073 = vsel %vm894, %v2062, 0
    %v2076 = vsel %vm901, %v2052, 0
    %2078 = vmatprep.subr.bf16.mxu0 0
    %2079 = vmatpush1.bf16.msra.mxu0 %v2076
    %2080 = vmatprep.subr.bf16.mxu0 0
    %2081 = vmatpush1.bf16.msra.mxu0 0
    %2082 = vmatprep.subr.bf16.mxu0 0
    %2083 = vmatpush1.bf16.msra.mxu0 0
    %2084 = vmatprep.subr.bf16.mxu0 0
    %2085 = vmatpush1.bf16.msra.mxu0 0
    %2086 = vmatprep.subr.bf16.mxu0 0
    %2087 = vmatpush1.bf16.msra.mxu0 0
    %2088 = vmatprep.subr.bf16.mxu0 0
    %2089 = vmatpush1.bf16.msra.mxu0 0
    %2090 = vmatprep.subr.bf16.mxu0 0
    %2091 = vmatpush1.bf16.msra.mxu0 0
    %2092 = vmatprep.subr.bf16.mxu0 0
    %2093 = vmatpush1.bf16.msra.mxu0 0
    %2094 = vmatprep.subr.bf16.mxu0 0
    %2095 = vmatpush1.bf16.msra.mxu0 0
    %2096 = vmatprep.subr.bf16.mxu0 0
    %2097 = vmatpush1.bf16.msra.mxu0 0
    %2098 = vmatprep.subr.bf16.mxu0 0
    %2099 = vmatpush1.bf16.msra.mxu0 0
    %2100 = vmatprep.subr.bf16.mxu0 0
    %2101 = vmatpush1.bf16.msra.mxu0 0
    %2102 = vmatprep.subr.bf16.mxu0 0
    %2103 = vmatpush1.bf16.msra.mxu0 0
    %2104 = vmatprep.subr.bf16.mxu0 0
    %2105 = vmatpush1.bf16.msra.mxu0 0
    %2106 = vmatprep.subr.bf16.mxu0 0
    %2107 = vmatpush1.bf16.msra.mxu0 0
    %2108 = vmatprep.subr.bf16.mxu0 0
    %2109 = vmatpush1.bf16.msra.mxu0 0
    %2110 = vmatprep.mubr.bf16.mxu0 0
    %2111 = vmatmul.mubr.bf16.gmra.mrb[0].mxu0 %v2070
    %v2112 = vpop.f32.mrb[0].mxu0
    %v2113 = vadd.f32 0.0, %v2112
    %v2114 = vpop.f32.mrb[0].mxu0
    %v2115 = vpop.f32.mrb[0].mxu0
    %v2116 = vadd.f32 0.0, %v2115
    %v2117 = vpop.f32.mrb[0].mxu0
    %2118 = vmatprep.mubr.bf16.mxu0 0
    %2119 = vmatmul.mubr.bf16.gmra.mrb[0].mxu0 %v2073
    %v2120 = vpop.f32.mrb[0].mxu0
    %v2121 = vadd.f32 0.0, %v2120
    %v2122 = vpop.f32.mrb[0].mxu0
    %v2123 = vpop.f32.mrb[0].mxu0
    %v2124 = vadd.f32 0.0, %v2123
    %v2125 = vpop.f32.mrb[0].mxu0
    %2126 = vdwg.mxu0
    %v2127 = vpack.c.bf16 %v2050, %v2050
    %2129 = vxpose.xlu0.c.b16.start [1/8] %v1993, 128
    %2130 = vxpose.xlu0.c.b16.cont [2/8] 0, 128
    %2131 = vxpose.xlu0.c.b16.cont [3/8] 0, 128
    %2132 = vxpose.xlu0.c.b16.cont [4/8] 0, 128
    %2133 = vxpose.xlu0.c.b16.cont [5/8] 0, 128
    %2134 = vxpose.xlu0.c.b16.cont [6/8] 0, 128
    %2135 = vxpose.xlu0.c.b16.cont [7/8] 0, 128
    %2136 = vxpose.xlu0.c.b16.end [8/8] 0, 128
    %v2137 = vpop.trf.xlu0
    %v2138 = vpop.trf.xlu0
    %v2139 = vpop.trf.xlu0
    %v2140 = vpop.trf.xlu0
    %v2141 = vpop.trf.xlu0
    %v2142 = vpop.trf.xlu0
    %v2143 = vpop.trf.xlu0
    %v2144 = vpop.trf.xlu0
    %v2146 = vsel %vm894, %v2137, 0
    %v2149 = vsel %vm894, %v2138, 0
    %v2152 = vsel %vm901, %v2127, 0
    %2154 = vmatprep.subr.bf16.mxu0 0
    %2155 = vmatpush1.bf16.msra.mxu0 %v2152
    %2156 = vmatprep.subr.bf16.mxu0 0
    %2157 = vmatpush1.bf16.msra.mxu0 0
    %2158 = vmatprep.subr.bf16.mxu0 0
    %2159 = vmatpush1.bf16.msra.mxu0 0
    %2160 = vmatprep.subr.bf16.mxu0 0
    %2161 = vmatpush1.bf16.msra.mxu0 0
    %2162 = vmatprep.subr.bf16.mxu0 0
    %2163 = vmatpush1.bf16.msra.mxu0 0
    %2164 = vmatprep.subr.bf16.mxu0 0
    %2165 = vmatpush1.bf16.msra.mxu0 0
    %2166 = vmatprep.subr.bf16.mxu0 0
    %2167 = vmatpush1.bf16.msra.mxu0 0
    %2168 = vmatprep.subr.bf16.mxu0 0
    %2169 = vmatpush1.bf16.msra.mxu0 0
    %2170 = vmatprep.subr.bf16.mxu0 0
    %2171 = vmatpush1.bf16.msra.mxu0 0
    %2172 = vmatprep.subr.bf16.mxu0 0
    %2173 = vmatpush1.bf16.msra.mxu0 0
    %2174 = vmatprep.subr.bf16.mxu0 0
    %2175 = vmatpush1.bf16.msra.mxu0 0
    %2176 = vmatprep.subr.bf16.mxu0 0
    %2177 = vmatpush1.bf16.msra.mxu0 0
    %2178 = vmatprep.subr.bf16.mxu0 0
    %2179 = vmatpush1.bf16.msra.mxu0 0
    %2180 = vmatprep.subr.bf16.mxu0 0
    %2181 = vmatpush1.bf16.msra.mxu0 0
    %2182 = vmatprep.subr.bf16.mxu0 0
    %2183 = vmatpush1.bf16.msra.mxu0 0
    %2184 = vmatprep.subr.bf16.mxu0 0
    %2185 = vmatpush1.bf16.msra.mxu0 0
    %2186 = vmatprep.mubr.bf16.mxu0 0
    %2187 = vmatmul.mubr.bf16.gmra.mrb[0].mxu0 %v2146
    %v2188 = vpop.f32.mrb[0].mxu0
    %v2189 = vadd.f32 0.0, %v2188
    %v2190 = vpop.f32.mrb[0].mxu0
    %v2191 = vpop.f32.mrb[0].mxu0
    %v2192 = vadd.f32 0.0, %v2191
    %v2193 = vpop.f32.mrb[0].mxu0
    %2194 = vmatprep.mubr.bf16.mxu0 0
    %2195 = vmatmul.mubr.bf16.gmra.mrb[0].mxu0 %v2149
    %v2196 = vpop.f32.mrb[0].mxu0
    %v2197 = vadd.f32 0.0, %v2196
    %v2198 = vpop.f32.mrb[0].mxu0
    %v2199 = vpop.f32.mrb[0].mxu0
    %v2200 = vadd.f32 0.0, %v2199
    %v2201 = vpop.f32.mrb[0].mxu0
    %2202 = vdwg.mxu0
    %v2203 = vsub.f32 %v2113, %v2189
    %v2204 = vsub.f32 %v2116, %v2192
    %v2205 = vsub.f32 %v2121, %v2197
    %v2206 = vsub.f32 %v2124, %v2200
    %v2207 = vmul.f32 %v2203, 0.001
    %v2208 = vmul.f32 %v2204, 0.001
    %v2209 = vmul.f32 %v2205, 0.001
    %v2210 = vmul.f32 %v2206, 0.001
    %v2211 = vadd.f32 %v1980, %v2207
    %v2212 = vadd.f32 %v1981, %v2208
    %v2213 = vadd.f32 %v1982, %v2209
    %v2214 = vadd.f32 %v1983, %v2210
    %v2215 = vmax.f32 %v815, %v2211
    %v2216 = vmax.f32 %v816, %v2212
    %v2217 = vmax.f32 %v817, %v2213
    %v2218 = vmax.f32 %v818, %v2214
    %v2219 = vmin.f32 %v819, %v2215
    %v2220 = vmin.f32 %v820, %v2216
    %v2221 = vmin.f32 %v821, %v2217
    %v2222 = vmin.f32 %v822, %v2218
    %2224 = vrot.lane.b32.xlu0 %v2040, 80
    %v2225 = vpop.permute.xlu0 %2224
    %vm2227 = vcmask 779904
    %2228 = vst.msk [vmem:[#allocation2] sm:$0x3] %vm2227, %v2225
    %v2229 = vpack.c.bf16 %v2220, %v2219
    %v2230 = vpack.c.bf16 %v2222, %v2221
    %v2231 = vrot.slane %v1756, 2
    %v2233 = vsel %vm827, %v2231, 0
    %2235 = vmatprep.subr.bf16.mxu0 0
    %2236 = vmatpush1.bf16.msra.mxu0 %v2229
    %2237 = vmatprep.subr.bf16.mxu0 0
    %2238 = vmatpush1.bf16.msra.mxu0 %v2230
    %2239 = vmatprep.subr.bf16.mxu0 0
    %2240 = vmatpush1.bf16.msra.mxu0 0
    %2241 = vmatprep.subr.bf16.mxu0 0
    %2242 = vmatpush1.bf16.msra.mxu0 0
    %2243 = vmatprep.subr.bf16.mxu0 0
    %2244 = vmatpush1.bf16.msra.mxu0 0
    %2245 = vmatprep.subr.bf16.mxu0 0
    %2246 = vmatpush1.bf16.msra.mxu0 0
    %2247 = vmatprep.subr.bf16.mxu0 0
    %2248 = vmatpush1.bf16.msra.mxu0 0
    %2249 = vmatprep.subr.bf16.mxu0 0
    %2250 = vmatpush1.bf16.msra.mxu0 0
    %2251 = vmatprep.subr.bf16.mxu0 0
    %2252 = vmatpush1.bf16.msra.mxu0 0
    %2253 = vmatprep.subr.bf16.mxu0 0
    %2254 = vmatpush1.bf16.msra.mxu0 0
    %2255 = vmatprep.subr.bf16.mxu0 0
    %2256 = vmatpush1.bf16.msra.mxu0 0
    %2257 = vmatprep.subr.bf16.mxu0 0
    %2258 = vmatpush1.bf16.msra.mxu0 0
    %2259 = vmatprep.subr.bf16.mxu0 0
    %2260 = vmatpush1.bf16.msra.mxu0 0
    %2261 = vmatprep.subr.bf16.mxu0 0
    %2262 = vmatpush1.bf16.msra.mxu0 0
    %2263 = vmatprep.subr.bf16.mxu0 0
    %2264 = vmatpush1.bf16.msra.mxu0 0
    %2265 = vmatprep.subr.bf16.mxu0 0
    %2266 = vmatpush1.bf16.msra.mxu0 0
    %2267 = vmatprep.mubr.bf16.mxu0 0
    %2268 = vmatmul.mubr.bf16.gmra.mrb[0].mxu0 %v2233
    %v2269 = vpop.f32.mrb[0].mxu0
    %v2270 = vadd.f32 0.0, %v2269
    %v2271 = vpop.f32.mrb[0].mxu0
    %v2272 = vpop.f32.mrb[0].mxu0
    %v2273 = vpop.f32.mrb[0].mxu0
    %2274 = vdwg.mxu0
    %v2275 = vmul.f32 %v2040, 0.9
    %v2276 = vsub.f32 1.0, %v2043
    %v2277 = vmul.f32 %v2275, %v2276
    %v2278 = vadd.f32 %v2277, %v2270
    %vm2279 = vcmp.ge.f32.partialorder %v2278, 0.5
    %v2280 = vsel %vm2279, 1, 0
    %v2281 = vcvt.s32.f32 %v2280
    %v2282 = vmul.f32 %v2048, 0.95122945
    %v2283 = vrot.slane %v802, 4
    %v2285 = vadd.f32 %v2282, %v2283
    %v2286 = vmul.f32 %v2050, 0.95122945
    %v2287 = vadd.f32 %v2286, %v2281
    %v2288 = vpack.c.bf16 %v2285, %v2285
    %v2289 = vpack.c.bf16 %v2281, %v2281
    %2290 = vxpose.xlu0.c.b16.start [1/8] %v2288, 128
    %2291 = vxpose.xlu0.c.b16.cont [2/8] 0, 128
    %2292 = vxpose.xlu0.c.b16.cont [3/8] 0, 128
    %2293 = vxpose.xlu0.c.b16.cont [4/8] 0, 128
    %2294 = vxpose.xlu0.c.b16.cont [5/8] 0, 128
    %2295 = vxpose.xlu0.c.b16.cont [6/8] 0, 128
    %2296 = vxpose.xlu0.c.b16.cont [7/8] 0, 128
    %2297 = vxpose.xlu0.c.b16.end [8/8] 0, 128
    %v2298 = vpop.trf.xlu0
    %v2299 = vpop.trf.xlu0
    %v2300 = vpop.trf.xlu0
    %v2301 = vpop.trf.xlu0
    %v2302 = vpop.trf.xlu0
    %v2303 = vpop.trf.xlu0
    %v2304 = vpop.trf.xlu0
    %v2305 = vpop.trf.xlu0
    %v2307 = vsel %vm894, %v2298, 0
    %v2310 = vsel %vm894, %v2299, 0
    %v2313 = vsel %vm901, %v2289, 0
    %2315 = vmatprep.subr.bf16.mxu0 0
    %2316 = vmatpush1.bf16.msra.mxu0 %v2313
    %2317 = vmatprep.subr.bf16.mxu0 0
    %2318 = vmatpush1.bf16.msra.mxu0 0
    %2319 = vmatprep.subr.bf16.mxu0 0
    %2320 = vmatpush1.bf16.msra.mxu0 0
    %2321 = vmatprep.subr.bf16.mxu0 0
    %2322 = vmatpush1.bf16.msra.mxu0 0
    %2323 = vmatprep.subr.bf16.mxu0 0
    %2324 = vmatpush1.bf16.msra.mxu0 0
    %2325 = vmatprep.subr.bf16.mxu0 0
    %2326 = vmatpush1.bf16.msra.mxu0 0
    %2327 = vmatprep.subr.bf16.mxu0 0
    %2328 = vmatpush1.bf16.msra.mxu0 0
    %2329 = vmatprep.subr.bf16.mxu0 0
    %2330 = vmatpush1.bf16.msra.mxu0 0
    %2331 = vmatprep.subr.bf16.mxu0 0
    %2332 = vmatpush1.bf16.msra.mxu0 0
    %2333 = vmatprep.subr.bf16.mxu0 0
    %2334 = vmatpush1.bf16.msra.mxu0 0
    %2335 = vmatprep.subr.bf16.mxu0 0
    %2336 = vmatpush1.bf16.msra.mxu0 0
    %2337 = vmatprep.subr.bf16.mxu0 0
    %2338 = vmatpush1.bf16.msra.mxu0 0
    %2339 = vmatprep.subr.bf16.mxu0 0
    %2340 = vmatpush1.bf16.msra.mxu0 0
    %2341 = vmatprep.subr.bf16.mxu0 0
    %2342 = vmatpush1.bf16.msra.mxu0 0
    %2343 = vmatprep.subr.bf16.mxu0 0
    %2344 = vmatpush1.bf16.msra.mxu0 0
    %2345 = vmatprep.subr.bf16.mxu0 0
    %2346 = vmatpush1.bf16.msra.mxu0 0
    %2347 = vmatprep.mubr.bf16.mxu0 0
    %2348 = vmatmul.mubr.bf16.gmra.mrb[0].mxu0 %v2307
    %v2349 = vpop.f32.mrb[0].mxu0
    %v2350 = vadd.f32 0.0, %v2349
    %v2351 = vpop.f32.mrb[0].mxu0
    %v2352 = vpop.f32.mrb[0].mxu0
    %v2353 = vadd.f32 0.0, %v2352
    %v2354 = vpop.f32.mrb[0].mxu0
    %2355 = vmatprep.mubr.bf16.mxu0 0
    %2356 = vmatmul.mubr.bf16.gmra.mrb[0].mxu0 %v2310
    %v2357 = vpop.f32.mrb[0].mxu0
    %v2358 = vadd.f32 0.0, %v2357
    %v2359 = vpop.f32.mrb[0].mxu0
    %v2360 = vpop.f32.mrb[0].mxu0
    %v2361 = vadd.f32 0.0, %v2360
    %v2362 = vpop.f32.mrb[0].mxu0
    %2363 = vdwg.mxu0
    %v2364 = vpack.c.bf16 %v2287, %v2287
    %2366 = vxpose.xlu0.c.b16.start [1/8] %v2231, 128
    %2367 = vxpose.xlu0.c.b16.cont [2/8] 0, 128
    %2368 = vxpose.xlu0.c.b16.cont [3/8] 0, 128
    %2369 = vxpose.xlu0.c.b16.cont [4/8] 0, 128
    %2370 = vxpose.xlu0.c.b16.cont [5/8] 0, 128
    %2371 = vxpose.xlu0.c.b16.cont [6/8] 0, 128
    %2372 = vxpose.xlu0.c.b16.cont [7/8] 0, 128
    %2373 = vxpose.xlu0.c.b16.end [8/8] 0, 128
    %v2374 = vpop.trf.xlu0
    %v2375 = vpop.trf.xlu0
    %v2376 = vpop.trf.xlu0
    %v2377 = vpop.trf.xlu0
    %v2378 = vpop.trf.xlu0
    %v2379 = vpop.trf.xlu0
    %v2380 = vpop.trf.xlu0
    %v2381 = vpop.trf.xlu0
    %v2383 = vsel %vm894, %v2374, 0
    %v2386 = vsel %vm894, %v2375, 0
    %v2389 = vsel %vm901, %v2364, 0
    %2391 = vmatprep.subr.bf16.mxu0 0
    %2392 = vmatpush1.bf16.msra.mxu0 %v2389
    %2393 = vmatprep.subr.bf16.mxu0 0
    %2394 = vmatpush1.bf16.msra.mxu0 0
    %2395 = vmatprep.subr.bf16.mxu0 0
    %2396 = vmatpush1.bf16.msra.mxu0 0
    %2397 = vmatprep.subr.bf16.mxu0 0
    %2398 = vmatpush1.bf16.msra.mxu0 0
    %2399 = vmatprep.subr.bf16.mxu0 0
    %2400 = vmatpush1.bf16.msra.mxu0 0
    %2401 = vmatprep.subr.bf16.mxu0 0
    %2402 = vmatpush1.bf16.msra.mxu0 0
    %2403 = vmatprep.subr.bf16.mxu0 0
    %2404 = vmatpush1.bf16.msra.mxu0 0
    %2405 = vmatprep.subr.bf16.mxu0 0
    %2406 = vmatpush1.bf16.msra.mxu0 0
    %2407 = vmatprep.subr.bf16.mxu0 0
    %2408 = vmatpush1.bf16.msra.mxu0 0
    %2409 = vmatprep.subr.bf16.mxu0 0
    %2410 = vmatpush1.bf16.msra.mxu0 0
    %2411 = vmatprep.subr.bf16.mxu0 0
    %2412 = vmatpush1.bf16.msra.mxu0 0
    %2413 = vmatprep.subr.bf16.mxu0 0
    %2414 = vmatpush1.bf16.msra.mxu0 0
    %2415 = vmatprep.subr.bf16.mxu0 0
    %2416 = vmatpush1.bf16.msra.mxu0 0
    %2417 = vmatprep.subr.bf16.mxu0 0
    %2418 = vmatpush1.bf16.msra.mxu0 0
    %2419 = vmatprep.subr.bf16.mxu0 0
    %2420 = vmatpush1.bf16.msra.mxu0 0
    %2421 = vmatprep.subr.bf16.mxu0 0
    %2422 = vmatpush1.bf16.msra.mxu0 0
    %2423 = vmatprep.mubr.bf16.mxu0 0
    %2424 = vmatmul.mubr.bf16.gmra.mrb[0].mxu0 %v2383
    %v2425 = vpop.f32.mrb[0].mxu0
    %v2426 = vadd.f32 0.0, %v2425
    %v2427 = vpop.f32.mrb[0].mxu0
    %v2428 = vpop.f32.mrb[0].mxu0
    %v2429 = vadd.f32 0.0, %v2428
    %v2430 = vpop.f32.mrb[0].mxu0
    %2431 = vmatprep.mubr.bf16.mxu0 0
    %2432 = vmatmul.mubr.bf16.gmra.mrb[0].mxu0 %v2386
    %v2433 = vpop.f32.mrb[0].mxu0
    %v2434 = vadd.f32 0.0, %v2433
    %v2435 = vpop.f32.mrb[0].mxu0
    %v2436 = vpop.f32.mrb[0].mxu0
    %v2437 = vadd.f32 0.0, %v2436
    %v2438 = vpop.f32.mrb[0].mxu0
    %2439 = vdwg.mxu0
    %v2440 = vsub.f32 %v2350, %v2426
    %v2441 = vsub.f32 %v2353, %v2429
    %v2442 = vsub.f32 %v2358, %v2434
    %v2443 = vsub.f32 %v2361, %v2437
    %v2444 = vmul.f32 %v2440, 0.001
    %v2445 = vmul.f32 %v2441, 0.001
    %v2446 = vmul.f32 %v2442, 0.001
    %v2447 = vmul.f32 %v2443, 0.001
    %v2448 = vadd.f32 %v2219, %v2444
    %v2449 = vadd.f32 %v2220, %v2445
    %v2450 = vadd.f32 %v2221, %v2446
    %v2451 = vadd.f32 %v2222, %v2447
    %v2452 = vmax.f32 %v815, %v2448
    %v2453 = vmax.f32 %v816, %v2449
    %v2454 = vmax.f32 %v817, %v2450
    %v2455 = vmax.f32 %v818, %v2451
    %v2456 = vmin.f32 %v819, %v2452
    %v2457 = vmin.f32 %v820, %v2453
    %v2458 = vmin.f32 %v821, %v2454
    %v2459 = vmin.f32 %v822, %v2455
    %2461 = vrot.lane.b32.xlu0 %v2278, 96
    %v2462 = vpop.permute.xlu0 %2461
    %vm2464 = vcmask 911104
    %2465 = vst.msk [vmem:[#allocation2] sm:$0x3] %vm2464, %v2462
    %v2466 = vpack.c.bf16 %v2457, %v2456
    %v2467 = vpack.c.bf16 %v2459, %v2458
    %v2468 = vrot.slane %v1756, 3
    %v2470 = vsel %vm827, %v2468, 0
    %2472 = vmatprep.subr.bf16.mxu0 0
    %2473 = vmatpush1.bf16.msra.mxu0 %v2466
    %2474 = vmatprep.subr.bf16.mxu0 0
    %2475 = vmatpush1.bf16.msra.mxu0 %v2467
    %2476 = vmatprep.subr.bf16.mxu0 0
    %2477 = vmatpush1.bf16.msra.mxu0 0
    %2478 = vmatprep.subr.bf16.mxu0 0
    %2479 = vmatpush1.bf16.msra.mxu0 0
    %2480 = vmatprep.subr.bf16.mxu0 0
    %2481 = vmatpush1.bf16.msra.mxu0 0
    %2482 = vmatprep.subr.bf16.mxu0 0
    %2483 = vmatpush1.bf16.msra.mxu0 0
    %2484 = vmatprep.subr.bf16.mxu0 0
    %2485 = vmatpush1.bf16.msra.mxu0 0
    %2486 = vmatprep.subr.bf16.mxu0 0
    %2487 = vmatpush1.bf16.msra.mxu0 0
    %2488 = vmatprep.subr.bf16.mxu0 0
    %2489 = vmatpush1.bf16.msra.mxu0 0
    %2490 = vmatprep.subr.bf16.mxu0 0
    %2491 = vmatpush1.bf16.msra.mxu0 0
    %2492 = vmatprep.subr.bf16.mxu0 0
    %2493 = vmatpush1.bf16.msra.mxu0 0
    %2494 = vmatprep.subr.bf16.mxu0 0
    %2495 = vmatpush1.bf16.msra.mxu0 0
    %2496 = vmatprep.subr.bf16.mxu0 0
    %2497 = vmatpush1.bf16.msra.mxu0 0
    %2498 = vmatprep.subr.bf16.mxu0 0
    %2499 = vmatpush1.bf16.msra.mxu0 0
    %2500 = vmatprep.subr.bf16.mxu0 0
    %2501 = vmatpush1.bf16.msra.mxu0 0
    %2502 = vmatprep.subr.bf16.mxu0 0
    %2503 = vmatpush1.bf16.msra.mxu0 0
    %2504 = vmatprep.mubr.bf16.mxu0 0
    %2505 = vmatmul.mubr.bf16.gmra.mrb[0].mxu0 %v2470
    %v2506 = vpop.f32.mrb[0].mxu0
    %v2507 = vadd.f32 0.0, %v2506
    %v2508 = vpop.f32.mrb[0].mxu0
    %v2509 = vpop.f32.mrb[0].mxu0
    %v2510 = vpop.f32.mrb[0].mxu0
    %2511 = vdwg.mxu0
    %v2512 = vmul.f32 %v2278, 0.9
    %v2513 = vsub.f32 1.0, %v2281
    %v2514 = vmul.f32 %v2512, %v2513
    %v2515 = vadd.f32 %v2514, %v2507
    %2517 = vrot.lane.b32.xlu0 %v2515, 112
    %v2518 = vpop.permute.xlu0 %2517
    %vm2520 = vcmask 1042304
    %2521 = vst.msk [vmem:[#allocation2] sm:$0x3] %vm2520, %v2518
    // Predicated region
    $region22: #{tpu_custom_call.1} parent=1 // pred_check
      _
    $region23: #{tpu_custom_call.1} parent=1 // pred_check_branch
      %2523 = sbr.rel (0) target = $region25
    $region24: #{tpu_custom_call.1} parent=1 // pred_region
      %s2525 = ssub.s32 32, 32
      %2526 = vsyncadd [#allocation3], %s2525
      %s2528 = sshll.u32 [#allocation2], 4
      %s2529 = int_to_ptr.vmem [resolvable:$true] %s2528
      %2531 = dma.vmem_to_hbm [thread:$0]  %s2529, 32, %s5, [#allocation3]
    $region25: #{tpu_custom_call.1} parent=1 // pred_fallthru
      _
    // Predicated region
    $region26: #{tpu_custom_call.1} parent=1 // pred_check
      _
    $region27: #{tpu_custom_call.1} parent=1 // pred_check_branch
      %2533 = sbr.rel (0) target = $region29
    $region28: #{tpu_custom_call.1} parent=1 // pred_region
      %2534 = dma.done [#allocation3], 32
    $region29: #{tpu_custom_call.1} parent=1 // pred_fallthru
      _
    %2535 = vsyncpa [#allocation3], 1

</llo_original>
